<compile_context>
chip_gen: v5e
topology: v5e:2x2
jax: 0.10.0
libtpu: 0.0.40
codegen_flags: <defaults>
</compile_context>

<pallas_src>
import functools

import jax
import jax.numpy as jnp
from jax import lax
from jax.experimental import pallas as pl
from jax.experimental.pallas import tpu as pltpu


def _round_up(v, m):
    return (v + m - 1) // m * m


def _vmem_capacity_bytes():
    """Physical VMEM of the attached TPU; conservative (v7x-sized) fallback."""
    try:
        return int(pltpu.get_tpu_info().vmem_capacity_bytes)
    except Exception:
        return 64 * 1024 * 1024


def _pick_length_tile(length, c, ci_pad, co_pad, in_bytes, out_bytes,
                      param_bytes, budget_bytes):
    """Largest length tile (multiple of 8, <= 1024 rows) whose *real* VMEM
    footprint — pipeline buffers, single-buffered resident weights, and live
    f32 intermediates — fits within `budget_bytes`."""
    resident = (ci_pad * 4 * co_pad * param_bytes     # fused weights, 1 buffer
                + co_pad * 4                          # bias (f32)
                + 2 * 2 * c * in_bytes)               # halo block, 2 buffers
    per_row = (2 * c * in_bytes                       # x block, 2 buffers
               + 2 * 2 * c * out_bytes                # out block, 2 buffers
               + 8 * co_pad * 4                       # live f32 temporaries
               + ci_pad * param_bytes)                # in-kernel cast/pad of x
    avail = budget_bytes - resident
    if avail <= per_row * 8:
        return 8
    tl = min(avail // per_row, 1024)
    tl = max(8, (tl // 8) * 8)
    return length if length <= tl else tl


def _upsample_conv_kernel(x_ref, halo_ref, w_ref, b_ref, o_ref, *,
                          c, ci_pad, co_pad, compute_dtype):
    """One (batch, length-tile) grid step.

    x_ref:    (1, TL, C)         input tile, original dtype (NLC layout)
    halo_ref: (1, 1, 2, C)       row 0 = x[tile_start-1] (0 at sequence start),
                                 row 1 = x[tile_end]     (0 at sequence end)
    w_ref:    (ci_pad, 4*co_pad) folded weights [W0 | W1+W2 | W0+W1 | W2],
                                 (C_in, C_out) orientation, compute dtype
    b_ref:    (1, co_pad)        bias, float32
    o_ref:    (1, TL, 2*C)       lanes [0:C] = out[2t], lanes [C:2C] = out[2t+1]
    """
    f32 = jnp.float32
    tl = x_ref.shape[1]

    x = x_ref[0].astype(compute_dtype)                 # (TL, C)
    halo = halo_ref[0, 0].astype(compute_dtype)        # (2, C)
    if ci_pad != c:                                    # pad K lanes in VMEM only
        x = jnp.concatenate(
            [x, jnp.zeros((tl, ci_pad - c), compute_dtype)], axis=-1)
        halo = jnp.concatenate(
            [halo, jnp.zeros((2, ci_pad - c), compute_dtype)], axis=-1)

    w = w_ref[...]                                     # (ci_pad, 4*co_pad)
    # One wide matmul (N = 4*co_pad) fills the MXU; f32 accumulation.
    y = jnp.dot(x, w, preferred_element_type=f32)      # (TL, 4*co_pad)
    h = jnp.dot(halo, w, preferred_element_type=f32)   # (2, 4*co_pad), tiny

    # 128-aligned lane slices of the fused result (free).
    y_ep = y[:, 0 * co_pad:1 * co_pad]                 # x[t] @ W0
    y_ec = y[:, 1 * co_pad:2 * co_pad]                 # x[t] @ (W1+W2)
    y_oc = y[:, 2 * co_pad:3 * co_pad]                 # x[t] @ (W0+W1)
    y_on = y[:, 3 * co_pad:4 * co_pad]                 # x[t] @ W2
    h_prev = h[0:1, 0 * co_pad:1 * co_pad]             # x[start-1] @ W0
    h_next = h[1:2, 3 * co_pad:4 * co_pad]             # x[end]     @ W2

    # +-1 row shifts via XLU roll; boundary row patched with the halo result.
    row = lax.broadcasted_iota(jnp.int32, (tl, 1), 0)
    ep_shift = jnp.where(row == 0, h_prev, pltpu.roll(y_ep, shift=1, axis=0))
    on_shift = jnp.where(row == tl - 1, h_next,
                         pltpu.roll(y_on, shift=tl - 1, axis=0))   # == shift -1

    bias = b_ref[...]                                  # (1, co_pad) f32
    even = ep_shift + y_ec + bias                      # out[2t]
    odd = y_oc + on_shift + bias                       # out[2t+1]

    # Split-lane store: even -> lanes [0:C], odd -> lanes [C:2C].  The wrapper
    # reshape (B, L, 2C) -> (B, 2L, C) interleaves the rows for free.
    if c % 128 == 0:
        o_ref[0, :, :c] = even.astype(o_ref.dtype)     # dense, lane-aligned
        o_ref[0, :, c:] = odd.astype(o_ref.dtype)
    else:
        tile = jnp.concatenate([even[:, :c], odd[:, :c]], axis=-1)
        o_ref[0] = tile.astype(o_ref.dtype)            # single narrow store


def upsample_forward_nlc(x_nlc, weight, bias, *, compute_dtype=jnp.bfloat16,
                         out_dtype=None, length_tile=None):
    """Core entry point in NLC layout: x (B, L, C) -> (B, 2L, C).

    Pass `out_dtype=jnp.bfloat16` to halve the (2x-row) writeback when the
    consumer accepts bf16 — the biggest HBM lever in the mem-bound regime.
    """
    B, L, C = x_nlc.shape
    if out_dtype is None:
        out_dtype = x_nlc.dtype
    f32 = jnp.float32

    # Fold the nearest-x2 upsample into the conv weights (in f32, then cast).
    w_t = jnp.transpose(weight.astype(f32), (2, 1, 0))         # (3, C_in, C_out)
    w0, w1, w2 = w_t[0], w_t[1], w_t[2]
    ci_pad = _round_up(C, 128)
    co_pad = _round_up(C, 128)
    pad = ((0, ci_pad - C), (0, co_pad - C))
    w_cat = jnp.concatenate(
        [jnp.pad(blk, pad) for blk in (w0, w1 + w2, w0 + w1, w2)],
        axis=1).astype(compute_dtype)                          # (ci_pad, 4*co_pad)
    b2 = jnp.pad(bias.astype(f32).reshape(1, C), ((0, 0), (0, co_pad - C)))

    # Length tile from real VMEM accounting (TPU-generation aware).
    in_bytes = jnp.dtype(x_nlc.dtype).itemsize
    out_bytes = jnp.dtype(out_dtype).itemsize
    param_bytes = jnp.dtype(compute_dtype).itemsize
    vmem_limit = int(_vmem_capacity_bytes() * 0.75)
    if length_tile is None:
        tl = _pick_length_tile(L, C, ci_pad, co_pad, in_bytes, out_bytes,
                               param_bytes, budget_bytes=int(vmem_limit * 0.6))
    else:
        tl = min(length_tile, L)
    if tl < L and tl % 8:
        raise ValueError("length tile must be a multiple of 8")

    # Pad L to a tile multiple (padded rows are zero, so the conv boundary
    # condition is preserved; extra output rows are trimmed afterwards).
    nl = -(-L // tl)
    l_pad = nl * tl
    x_p = x_nlc if l_pad == L else jnp.pad(
        x_nlc, ((0, 0), (0, l_pad - L), (0, 0)))

    # 1-row halos per tile, gathered once in the wrapper (tiny strided reads);
    # x itself is read from HBM exactly once, unpadded, by the kernel.
    zero_row = jnp.zeros((B, 1, C), dtype=x_p.dtype)
    if nl > 1:
        prev_halo = jnp.concatenate(
            [zero_row, x_p[:, tl - 1:l_pad - 1:tl, :]], axis=1)
        next_halo = jnp.concatenate(
            [x_p[:, tl:l_pad:tl, :], zero_row], axis=1)
    else:
        prev_halo, next_halo = zero_row, zero_row
    halo = jnp.stack([prev_halo, next_halo], axis=2)           # (B, nl, 2, C)

    kernel = functools.partial(_upsample_conv_kernel, c=C, ci_pad=ci_pad,
                               co_pad=co_pad, compute_dtype=compute_dtype)

    def _run(single_buffer_params):
        # Weights / bias are grid-invariant: constant index maps keep them
        # VMEM-resident; pl.Buffered(1) drops the redundant second buffer.
        pm = {"pipeline_mode": pl.Buffered(1)} if single_buffer_params else {}
        return pl.pallas_call(
            kernel,
            out_shape=jax.ShapeDtypeStruct((B, l_pad, 2 * C), out_dtype),
            grid_spec=pltpu.PrefetchScalarGridSpec(
                num_scalar_prefetch=0,
                grid=(B, nl),
                in_specs=[
                    pl.BlockSpec((1, tl, C), lambda b, l: (b, l, 0)),
                    pl.BlockSpec((1, 1, 2, C), lambda b, l: (b, l, 0, 0)),
                    pl.BlockSpec((ci_pad, 4 * co_pad), lambda b, l: (0, 0), **pm),
                    pl.BlockSpec((1, co_pad), lambda b, l: (0, 0), **pm),
                ],
                out_specs=pl.BlockSpec((1, tl, 2 * C), lambda b, l: (b, l, 0)),
            ),
            compiler_params=pltpu.CompilerParams(
                dimension_semantics=("parallel", "parallel"),
                vmem_limit_bytes=vmem_limit,
            ),
        )(x_p, halo, w_cat, b2)

    try:
        out = _run(True)
    except Exception:  # this Pallas build rejects single-buffer pipeline_mode
        out = _run(False)

    # (B, l_pad, 2C) -> (B, 2*l_pad, C) is a free row-major reshape that
    # interleaves the even/odd conv outputs; trim the length padding if any.
    out = out.reshape(B, 2 * l_pad, C)
    return out if l_pad == L else out[:, :2 * L, :]


def upsample_forward(x_ncl, weight, bias, *, compute_dtype=jnp.bfloat16,
                     out_dtype=None, length_tile=None):
    """PyTorch-compatible entry point: x (B, C, L) -> (B, C, 2L).

    The two transposes only exist to match the NCL module interface; in a real
    model keep activations NLC end-to-end and call `upsample_forward_nlc`
    (each transpose is an extra full HBM pass over the activation).
    """
    x_nlc = jnp.transpose(x_ncl, (0, 2, 1))                    # (B, L, C)
    out_nlc = upsample_forward_nlc(
        x_nlc, weight, bias, compute_dtype=compute_dtype,
        out_dtype=out_dtype, length_tile=length_tile)          # (B, 2L, C)
    return jnp.transpose(out_nlc, (0, 2, 1))                   # (B, C, 2L)


def _reference(x_ncl, weight, bias):
    """Pure-JAX reference: nearest x2 upsample + conv1d (padding=1)."""
    x_up = jnp.repeat(x_ncl, 2, axis=2)                        # (B, C, 2L)
    out = lax.conv_general_dilated(
        x_up, weight,
        window_strides=(1,),
        padding=[(1, 1)],
        dimension_numbers=("NCH", "OIH", "NCH"),
        precision=lax.Precision.HIGHEST,
    )
    return out + bias[None, :, None]


if __name__ == "__main__":
    def make(B, C, L, k):
        kx, kw, kb = jax.random.split(k, 3)
        x = jax.random.normal(kx, (B, C, L), dtype=jnp.float32)
        w = jax.random.normal(kw, (C, C, 3), dtype=jnp.float32) * 0.1
        b = jax.random.normal(kb, (C,), dtype=jnp.float32) * 0.1
        return x, w, b

    k0, k1, k2 = jax.random.split(jax.random.PRNGKey(0), 3)

    # 1) Module-default small shape, f32 compute path (tight check).
    x, w, b = make(2, 4, 16, k0)
    ref = _reference(x, w, b)
    out = jax.block_until_ready(
        upsample_forward(x, w, b, compute_dtype=jnp.float32))
    assert out.shape == (2, 4, 32), out.shape
    assert jnp.allclose(out, ref, atol=1e-4, rtol=1e-4), "f32 mismatch"

    # 2) bf16 MXU inputs (recommended on v6e/v7x), f32 accumulation.
    out_bf16 = jax.block_until_ready(
        upsample_forward(x, w, b, compute_dtype=jnp.bfloat16))
    assert out_bf16.shape == (2, 4, 32), out_bf16.shape
    assert jnp.allclose(out_bf16, ref, atol=2e-2, rtol=2e-2), "bf16 mismatch"

    # 3) Multi-tile grid with non-divisible L (length padding + halo path).
    x3, w3, b3 = make(2, 4, 13, k1)
    ref3 = _reference(x3, w3, b3)
    out3 = jax.block_until_ready(
        upsample_forward(x3, w3, b3, compute_dtype=jnp.float32, length_tile=8))
    assert out3.shape == (2, 4, 26), out3.shape
    assert jnp.allclose(out3, ref3, atol=1e-4, rtol=1e-4), "padded-L mismatch"

    # 4) Lane-aligned channels (dense split-store path), multi-tile.
    x4, w4, b4 = make(1, 128, 16, k2)
    ref4 = _reference(x4, w4, b4)
    out4 = jax.block_until_ready(
        upsample_forward(x4, w4, b4, compute_dtype=jnp.float32, length_tile=8))
    assert out4.shape == (1, 128, 32), out4.shape
    assert jnp.allclose(out4, ref4, atol=1e-3, rtol=1e-3), "C=128 mismatch"

    print("KERNEL_OK")
</pallas_src>

<mosaic_0001>
module attributes {stable_mosaic.version = 11 : i64} {
  func.func @_upsample_conv_kernel(%arg0: i32, %arg1: i32, %arg2: memref<1x16x4xf32, #tpu.memory_space<vmem>>, %arg3: memref<1x1x2x4xf32, #tpu.memory_space<vmem>>, %arg4: memref<128x512xf32, #tpu.memory_space<vmem>>, %arg5: memref<1x128xf32, #tpu.memory_space<vmem>>, %arg6: memref<1x16x8xf32, #tpu.memory_space<vmem>>) attributes {dimension_semantics = [#tpu.dimension_semantics<parallel>, #tpu.dimension_semantics<parallel>], iteration_bounds = array<i64: 2, 1>, scalar_prefetch = 0 : i64, scratch_operands = 0 : i64, tpu.core_type = #tpu.core_type<tc>, window_params = [{transform_indices = @transform_0, window_bounds = array<i64: 1, 16, 4>}, {transform_indices = @transform_1, window_bounds = array<i64: 1, 1, 2, 4>}, {pipeline_mode = #tpu.pipeline_mode<synchronous>, transform_indices = @transform_2, window_bounds = array<i64: 128, 512>}, {pipeline_mode = #tpu.pipeline_mode<synchronous>, transform_indices = @transform_3, window_bounds = array<i64: 1, 128>}, {transform_indices = @transform_4, window_bounds = array<i64: 1, 16, 8>}]} {
    %c0 = arith.constant 0 : index
    %c0_0 = arith.constant 0 : index
    %c0_1 = arith.constant 0 : index
    %0 = vector.load %arg2[%c0, %c0_0, %c0_1] : memref<1x16x4xf32, #tpu.memory_space<vmem>>, vector<1x16x4xf32>
    %1 = vector.shape_cast %0 : vector<1x16x4xf32> to vector<16x4xf32>
    %c0_2 = arith.constant 0 : index
    %c0_3 = arith.constant 0 : index
    %c0_4 = arith.constant 0 : index
    %c0_5 = arith.constant 0 : index
    %2 = vector.load %arg3[%c0_2, %c0_3, %c0_4, %c0_5] : memref<1x1x2x4xf32, #tpu.memory_space<vmem>>, vector<1x1x2x4xf32>
    %3 = vector.shape_cast %2 : vector<1x1x2x4xf32> to vector<2x4xf32>
    %cst = arith.constant 0.000000e+00 : f32
    %4 = vector.broadcast %cst : f32 to vector<16x124xf32>
    %5 = tpu.concatenate %1, %4 in 1 : vector<16x4xf32>, vector<16x124xf32> -> vector<16x128xf32>
    %cst_6 = arith.constant 0.000000e+00 : f32
    %6 = vector.broadcast %cst_6 : f32 to vector<2x124xf32>
    %7 = tpu.concatenate %3, %6 in 1 : vector<2x4xf32>, vector<2x124xf32> -> vector<2x128xf32>
    %c0_7 = arith.constant 0 : index
    %c0_8 = arith.constant 0 : index
    %8 = vector.load %arg4[%c0_7, %c0_8] : memref<128x512xf32, #tpu.memory_space<vmem>>, vector<128x512xf32>
    %cst_9 = arith.constant dense<0.000000e+00> : vector<16x512xf32>
    %9 = tpu.matmul %5, %8, %cst_9 {dimension_numbers = #tpu.dot_dimension_numbers<[1], [0], [0], [1], [0, 0, 1, 1], [], []>} : vector<16x128xf32>, vector<128x512xf32>, vector<16x512xf32> -> vector<16x512xf32>
    %cst_10 = arith.constant dense<0.000000e+00> : vector<2x512xf32>
    %10 = tpu.matmul %7, %8, %cst_10 {dimension_numbers = #tpu.dot_dimension_numbers<[1], [0], [0], [1], [0, 0, 1, 1], [], []>} : vector<2x128xf32>, vector<128x512xf32>, vector<2x512xf32> -> vector<2x512xf32>
    %11 = vector.extract_strided_slice %9 {offsets = [0, 0], sizes = [16, 128], strides = [1, 1]} : vector<16x512xf32> to vector<16x128xf32>
    %12 = vector.extract_strided_slice %9 {offsets = [0, 128], sizes = [16, 128], strides = [1, 1]} : vector<16x512xf32> to vector<16x128xf32>
    %13 = vector.extract_strided_slice %9 {offsets = [0, 256], sizes = [16, 128], strides = [1, 1]} : vector<16x512xf32> to vector<16x128xf32>
    %14 = vector.extract_strided_slice %9 {offsets = [0, 384], sizes = [16, 128], strides = [1, 1]} : vector<16x512xf32> to vector<16x128xf32>
    %15 = vector.extract_strided_slice %10 {offsets = [0, 0], sizes = [1, 128], strides = [1, 1]} : vector<2x512xf32> to vector<1x128xf32>
    %16 = vector.extract_strided_slice %10 {offsets = [1, 384], sizes = [1, 128], strides = [1, 1]} : vector<2x512xf32> to vector<1x128xf32>
    %17 = tpu.iota {dimensions = array<i32: 0>} : vector<16x1xi32>
    %c0_i32 = arith.constant 0 : i32
    %18 = vector.broadcast %c0_i32 : i32 to vector<16x1xi32>
    %19 = arith.cmpi eq, %17, %18 : vector<16x1xi32>
    %c1_i32 = arith.constant 1 : i32
    %20 = tpu.dynamic_rotate %11 by %c1_i32 dim 0 : vector<16x128xf32>, i32 -> vector<16x128xf32>
    %21 = vector.shape_cast %19 : vector<16x1xi1> to vector<16x1xi1>
    %22 = vector.broadcast %21 : vector<16x1xi1> to vector<16x128xi1>
    %23 = vector.shape_cast %15 : vector<1x128xf32> to vector<1x128xf32>
    %24 = vector.broadcast %23 : vector<1x128xf32> to vector<16x128xf32>
    %25 = arith.select %22, %24, %20 : vector<16x128xi1>, vector<16x128xf32>
    %c15_i32 = arith.constant 15 : i32
    %26 = vector.broadcast %c15_i32 : i32 to vector<16x1xi32>
    %27 = arith.cmpi eq, %17, %26 : vector<16x1xi32>
    %c15_i32_11 = arith.constant 15 : i32
    %28 = tpu.dynamic_rotate %14 by %c15_i32_11 dim 0 : vector<16x128xf32>, i32 -> vector<16x128xf32>
    %29 = vector.shape_cast %27 : vector<16x1xi1> to vector<16x1xi1>
    %30 = vector.broadcast %29 : vector<16x1xi1> to vector<16x128xi1>
    %31 = vector.shape_cast %16 : vector<1x128xf32> to vector<1x128xf32>
    %32 = vector.broadcast %31 : vector<1x128xf32> to vector<16x128xf32>
    %33 = arith.select %30, %32, %28 : vector<16x128xi1>, vector<16x128xf32>
    %c0_12 = arith.constant 0 : index
    %c0_13 = arith.constant 0 : index
    %34 = vector.load %arg5[%c0_12, %c0_13] : memref<1x128xf32, #tpu.memory_space<vmem>>, vector<1x128xf32>
    %35 = arith.addf %25, %12 : vector<16x128xf32>
    %36 = vector.broadcast %34 : vector<1x128xf32> to vector<16x128xf32>
    %37 = arith.addf %35, %36 : vector<16x128xf32>
    %38 = arith.addf %13, %33 : vector<16x128xf32>
    %39 = vector.broadcast %34 : vector<1x128xf32> to vector<16x128xf32>
    %40 = arith.addf %38, %39 : vector<16x128xf32>
    %41 = vector.extract_strided_slice %37 {offsets = [0, 0], sizes = [16, 4], strides = [1, 1]} : vector<16x128xf32> to vector<16x4xf32>
    %42 = vector.extract_strided_slice %40 {offsets = [0, 0], sizes = [16, 4], strides = [1, 1]} : vector<16x128xf32> to vector<16x4xf32>
    %43 = tpu.concatenate %41, %42 in 1 : vector<16x4xf32>, vector<16x4xf32> -> vector<16x8xf32>
    %c0_14 = arith.constant 0 : index
    %c0_15 = arith.constant 0 : index
    %c0_16 = arith.constant 0 : index
    %44 = vector.load %arg6[%c0_14, %c0_15, %c0_16] : memref<1x16x8xf32, #tpu.memory_space<vmem>>, vector<1x16x8xf32>
    %45 = vector.shape_cast %44 : vector<1x16x8xf32> to vector<16x8xf32>
    %46 = vector.shape_cast %43 : vector<16x8xf32> to vector<1x16x8xf32>
    tpu.vector_store %arg6[%c0_14, %c0_15, %c0_16], %46 {strides = array<i32>} : memref<1x16x8xf32, #tpu.memory_space<vmem>>, vector<1x16x8xf32>,
    return
  }
  func.func @transform_0(%arg0: i32, %arg1: i32) -> (i32, i32, i32) {
    %c0_i32 = arith.constant 0 : i32
    %c0_i32_0 = arith.constant 0 : i32
    return %arg0, %arg1, %c0_i32 : i32, i32, i32
  }
  func.func @transform_1(%arg0: i32, %arg1: i32) -> (i32, i32, i32, i32) {
    %c0_i32 = arith.constant 0 : i32
    %c0_i32_0 = arith.constant 0 : i32
    %c0_i32_1 = arith.constant 0 : i32
    return %arg0, %arg1, %c0_i32, %c0_i32_0 : i32, i32, i32, i32
  }
  func.func @transform_2(%arg0: i32, %arg1: i32) -> (i32, i32) {
    %c0_i32 = arith.constant 0 : i32
    %c0_i32_0 = arith.constant 0 : i32
    %c0_i32_1 = arith.constant 0 : i32
    return %c0_i32, %c0_i32_0 : i32, i32
  }
  func.func @transform_3(%arg0: i32, %arg1: i32) -> (i32, i32) {
    %c0_i32 = arith.constant 0 : i32
    %c0_i32_0 = arith.constant 0 : i32
    %c0_i32_1 = arith.constant 0 : i32
    return %c0_i32, %c0_i32_0 : i32, i32
  }
  func.func @transform_4(%arg0: i32, %arg1: i32) -> (i32, i32, i32) {
    %c0_i32 = arith.constant 0 : i32
    %c0_i32_0 = arith.constant 0 : i32
    return %arg0, %arg1, %c0_i32 : i32, i32, i32
  }
}

module attributes {stable_mosaic.version = 11 : i64} {
  func.func @_upsample_conv_kernel(%arg0: i32, %arg1: i32, %arg2: memref<1x16x4xf32, #tpu.memory_space<vmem>>, %arg3: memref<1x1x2x4xf32, #tpu.memory_space<vmem>>, %arg4: memref<128x512xf32, #tpu.memory_space<vmem>>, %arg5: memref<1x128xf32, #tpu.memory_space<vmem>>, %arg6: memref<1x16x8xf32, #tpu.memory_space<vmem>>) attributes {dimension_semantics = [#tpu.dimension_semantics<parallel>, #tpu.dimension_semantics<parallel>], iteration_bounds = array<i64: 2, 1>, scalar_prefetch = 0 : i64, scratch_operands = 0 : i64, tpu.core_type = #tpu.core_type<tc>, window_params = [{transform_indices = @transform_0, window_bounds = array<i64: 1, 16, 4>}, {transform_indices = @transform_1, window_bounds = array<i64: 1, 1, 2, 4>}, {pipeline_mode = #tpu.pipeline_mode<synchronous>, transform_indices = @transform_2, window_bounds = array<i64: 128, 512>}, {pipeline_mode = #tpu.pipeline_mode<synchronous>, transform_indices = @transform_3, window_bounds = array<i64: 1, 128>}, {transform_indices = @transform_4, window_bounds = array<i64: 1, 16, 8>}]} {
    %c0 = arith.constant 0 : index
    %c0_0 = arith.constant 0 : index
    %c0_1 = arith.constant 0 : index
    %0 = vector.load %arg2[%c0, %c0_0, %c0_1] : memref<1x16x4xf32, #tpu.memory_space<vmem>>, vector<1x16x4xf32>
    %1 = vector.shape_cast %0 : vector<1x16x4xf32> to vector<16x4xf32>
    %c0_2 = arith.constant 0 : index
    %c0_3 = arith.constant 0 : index
    %c0_4 = arith.constant 0 : index
    %c0_5 = arith.constant 0 : index
    %2 = vector.load %arg3[%c0_2, %c0_3, %c0_4, %c0_5] : memref<1x1x2x4xf32, #tpu.memory_space<vmem>>, vector<1x1x2x4xf32>
    %3 = vector.shape_cast %2 : vector<1x1x2x4xf32> to vector<2x4xf32>
    %cst = arith.constant 0.000000e+00 : f32
    %4 = vector.broadcast %cst : f32 to vector<16x124xf32>
    %5 = tpu.concatenate %1, %4 in 1 : vector<16x4xf32>, vector<16x124xf32> -> vector<16x128xf32>
    %cst_6 = arith.constant 0.000000e+00 : f32
    %6 = vector.broadcast %cst_6 : f32 to vector<2x124xf32>
    %7 = tpu.concatenate %3, %6 in 1 : vector<2x4xf32>, vector<2x124xf32> -> vector<2x128xf32>
    %c0_7 = arith.constant 0 : index
    %c0_8 = arith.constant 0 : index
    %8 = vector.load %arg4[%c0_7, %c0_8] : memref<128x512xf32, #tpu.memory_space<vmem>>, vector<128x512xf32>
    %cst_9 = arith.constant dense<0.000000e+00> : vector<16x512xf32>
    %9 = tpu.matmul %5, %8, %cst_9 {dimension_numbers = #tpu.dot_dimension_numbers<[1], [0], [0], [1], [0, 0, 1, 1], [], []>} : vector<16x128xf32>, vector<128x512xf32>, vector<16x512xf32> -> vector<16x512xf32>
    %cst_10 = arith.constant dense<0.000000e+00> : vector<2x512xf32>
    %10 = tpu.matmul %7, %8, %cst_10 {dimension_numbers = #tpu.dot_dimension_numbers<[1], [0], [0], [1], [0, 0, 1, 1], [], []>} : vector<2x128xf32>, vector<128x512xf32>, vector<2x512xf32> -> vector<2x512xf32>
    %11 = vector.extract_strided_slice %9 {offsets = [0, 0], sizes = [16, 128], strides = [1, 1]} : vector<16x512xf32> to vector<16x128xf32>
    %12 = vector.extract_strided_slice %9 {offsets = [0, 128], sizes = [16, 128], strides = [1, 1]} : vector<16x512xf32> to vector<16x128xf32>
    %13 = vector.extract_strided_slice %9 {offsets = [0, 256], sizes = [16, 128], strides = [1, 1]} : vector<16x512xf32> to vector<16x128xf32>
    %14 = vector.extract_strided_slice %9 {offsets = [0, 384], sizes = [16, 128], strides = [1, 1]} : vector<16x512xf32> to vector<16x128xf32>
    %15 = vector.extract_strided_slice %10 {offsets = [0, 0], sizes = [1, 128], strides = [1, 1]} : vector<2x512xf32> to vector<1x128xf32>
    %16 = vector.extract_strided_slice %10 {offsets = [1, 384], sizes = [1, 128], strides = [1, 1]} : vector<2x512xf32> to vector<1x128xf32>
    %17 = tpu.iota {dimensions = array<i32: 0>} : vector<16x1xi32>
    %c0_i32 = arith.constant 0 : i32
    %18 = vector.broadcast %c0_i32 : i32 to vector<16x1xi32>
    %19 = arith.cmpi eq, %17, %18 : vector<16x1xi32>
    %c1_i32 = arith.constant 1 : i32
    %20 = tpu.dynamic_rotate %11 by %c1_i32 dim 0 : vector<16x128xf32>, i32 -> vector<16x128xf32>
    %21 = vector.shape_cast %19 : vector<16x1xi1> to vector<16x1xi1>
    %22 = vector.broadcast %21 : vector<16x1xi1> to vector<16x128xi1>
    %23 = vector.shape_cast %15 : vector<1x128xf32> to vector<1x128xf32>
    %24 = vector.broadcast %23 : vector<1x128xf32> to vector<16x128xf32>
    %25 = arith.select %22, %24, %20 : vector<16x128xi1>, vector<16x128xf32>
    %c15_i32 = arith.constant 15 : i32
    %26 = vector.broadcast %c15_i32 : i32 to vector<16x1xi32>
    %27 = arith.cmpi eq, %17, %26 : vector<16x1xi32>
    %c15_i32_11 = arith.constant 15 : i32
    %28 = tpu.dynamic_rotate %14 by %c15_i32_11 dim 0 : vector<16x128xf32>, i32 -> vector<16x128xf32>
    %29 = vector.shape_cast %27 : vector<16x1xi1> to vector<16x1xi1>
    %30 = vector.broadcast %29 : vector<16x1xi1> to vector<16x128xi1>
    %31 = vector.shape_cast %16 : vector<1x128xf32> to vector<1x128xf32>
    %32 = vector.broadcast %31 : vector<1x128xf32> to vector<16x128xf32>
    %33 = arith.select %30, %32, %28 : vector<16x128xi1>, vector<16x128xf32>
    %c0_12 = arith.constant 0 : index
    %c0_13 = arith.constant 0 : index
    %34 = vector.load %arg5[%c0_12, %c0_13] : memref<1x128xf32, #tpu.memory_space<vmem>>, vector<1x128xf32>
    %35 = arith.addf %25, %12 : vector<16x128xf32>
    %36 = vector.broadcast %34 : vector<1x128xf32> to vector<16x128xf32>
    %37 = arith.addf %35, %36 : vector<16x128xf32>
    %38 = arith.addf %13, %33 : vector<16x128xf32>
    %39 = vector.broadcast %34 : vector<1x128xf32> to vector<16x128xf32>
    %40 = arith.addf %38, %39 : vector<16x128xf32>
    %41 = vector.extract_strided_slice %37 {offsets = [0, 0], sizes = [16, 4], strides = [1, 1]} : vector<16x128xf32> to vector<16x4xf32>
    %42 = vector.extract_strided_slice %40 {offsets = [0, 0], sizes = [16, 4], strides = [1, 1]} : vector<16x128xf32> to vector<16x4xf32>
    %43 = tpu.concatenate %41, %42 in 1 : vector<16x4xf32>, vector<16x4xf32> -> vector<16x8xf32>
    %c0_14 = arith.constant 0 : index
    %c0_15 = arith.constant 0 : index
    %c0_16 = arith.constant 0 : index
    %44 = vector.load %arg6[%c0_14, %c0_15, %c0_16] : memref<1x16x8xf32, #tpu.memory_space<vmem>>, vector<1x16x8xf32>
    %45 = vector.shape_cast %44 : vector<1x16x8xf32> to vector<16x8xf32>
    %46 = vector.shape_cast %43 : vector<16x8xf32> to vector<1x16x8xf32>
    tpu.vector_store %arg6[%c0_14, %c0_15, %c0_16], %46 {strides = array<i32>} : memref<1x16x8xf32, #tpu.memory_space<vmem>>, vector<1x16x8xf32>,
    return
  }
  func.func @transform_0(%arg0: i32, %arg1: i32) -> (i32, i32, i32) {
    %c0_i32 = arith.constant 0 : i32
    %c0_i32_0 = arith.constant 0 : i32
    return %arg0, %arg1, %c0_i32 : i32, i32, i32
  }
  func.func @transform_1(%arg0: i32, %arg1: i32) -> (i32, i32, i32, i32) {
    %c0_i32 = arith.constant 0 : i32
    %c0_i32_0 = arith.constant 0 : i32
    %c0_i32_1 = arith.constant 0 : i32
    return %arg0, %arg1, %c0_i32, %c0_i32_0 : i32, i32, i32, i32
  }
  func.func @transform_2(%arg0: i32, %arg1: i32) -> (i32, i32) {
    %c0_i32 = arith.constant 0 : i32
    %c0_i32_0 = arith.constant 0 : i32
    %c0_i32_1 = arith.constant 0 : i32
    return %c0_i32, %c0_i32_0 : i32, i32
  }
  func.func @transform_3(%arg0: i32, %arg1: i32) -> (i32, i32) {
    %c0_i32 = arith.constant 0 : i32
    %c0_i32_0 = arith.constant 0 : i32
    %c0_i32_1 = arith.constant 0 : i32
    return %c0_i32, %c0_i32_0 : i32, i32
  }
  func.func @transform_4(%arg0: i32, %arg1: i32) -> (i32, i32, i32) {
    %c0_i32 = arith.constant 0 : i32
    %c0_i32_0 = arith.constant 0 : i32
    return %arg0, %arg1, %c0_i32 : i32, i32, i32
  }
}

</mosaic_0001>

<llo_original>
// kernel: tpu_custom_call.1
$region0: #{tpu_custom_call.1}
  #allocation0 [shape = 'u32[]', space=smem, size = 0x4, offset = 0x4, fixed_abs, tag = 'smem constant byte address 0x4 - core index']
  #allocation1 [shape = 'u32[72,128]{1,0:T(1,128)}', space=vmem, size = 0x9000, scoped, tag = 'internal scratch']
  %s0 = inlined_call_operand.vmem [shape: f32[2,16,4], index: 0, kind: input, shape index: {}]
  %s1 = inlined_call_operand.vmem [shape: f32[2,1,2,4], index: 1, kind: input, shape index: {}]
  %s2 = inlined_call_operand.hbm [shape: f32[128,512], index: 2, kind: input, shape index: {}]
  %s3 = inlined_call_operand.vmem [shape: f32[1,128], index: 3, kind: input, shape index: {}]
  %s4 = inlined_call_operand.vmem [shape: f32[2,16,8], index: 4, kind: output, shape index: {}]
  %s5 = sld [smem:[#allocation0]]
  $region53: #{tpu_custom_call.1} parent=0
    _
  %s7 = ssub.s32 1, %s5
  %s8 = scalar_select 0, %s7, %s5
  $region1: #{tpu_custom_call.1} parent=0
    #allocation2 [shape = 'u8[262144]{0}', space=vmem, size = 0x40000, scoped, tag = 'input window, operand 2, single buffered']
    #allocation3 [shape = 's32[2]{0}', space=sflag, size = 0x8, scoped, tag = 'scoped memory for tpu_custom_call.1']
    %9 = vsyncpa [#allocation3], 0
    loop: start=0, step=1, limit=4
    $region2: #{tpu_custom_call.1} parent=1 // loop_pre_header
      _
    $region3: #{tpu_custom_call.1} parent=1 // loop_header
      %s11 = sphi 0, %s15
      %p12 = scmp.ge.s32.totalorder %s11, 4
      %s18 = sphi 0, %s30
      %s19 = sphi 0, %s26
      %s20 = sphi 0, %s18
      %s21 = sphi 0, %s19
      %s22 = sphi 0, %s20
      %s23 = sphi 0, %s21
      %s35 = sphi 0, %s37
      %s38 = sphi 0, %s35
      %s39 = sphi 0, %s38
      %s55 = sphi 0, %s39
      %s63 = sphi 0, %s65
      %s66 = sphi 0, %s63
      %s67 = sphi 0, %s66
      %s83 = sphi 0, %s67
      %s87 = sphi 0, %s87
      %s89 = sphi 0, %s87
      %s90 = sphi 0, %s89
      %s104 = sphi 0, %s90
      %s108 = sphi 0, %s108
      %s110 = sphi 0, %s108
      %s111 = sphi 0, %s110
      %s125 = sphi 0, %s111
      %s133 = sphi 0, %s135
      %s136 = sphi 0, %s133
      %s137 = sphi 0, %s136
      %s153 = sphi 0, %s137
    $region4: #{tpu_custom_call.1} parent=1 // loop_header_branch
      %14 = sbr.rel (%p12) target = $region8
    $region5: #{tpu_custom_call.1} parent=1 // loop_body
      %s16 = ssub.s32 %s11, 1
      %s17 = ssub.s32 %s11, 2
      %s24 = sadd.s32 1, %s19
      %p25 = scmp.ge.s32.totalorder %s24, 1
      %s26 = scalar_select %p25, 0, %s24
      %s27 = sadd.s32 1, %s18
      %s28 = scalar_select %p25, %s27, %s18
      %p29 = scmp.ge.s32.totalorder %s28, 2
      %s30 = scalar_select %p29, 0, %s28
      %s31 = ssub.s32 %s18, %s30
      %s32 = ssub.s32 %s19, %s26
      %s33 = sor.u32 %s31, %s32
      %p34 = scmp.eq.s32.totalorder %s33, 0
      %s36 = sadd.s32 %s35, 1
      %s37 = scalar_select %p34, %s35, %s36
      %p40 = pneg %p34
      %p41 = scmp.eq.s32.totalorder %s11, 1
      %p42 = por %p40, %p41
      %p43 = scmp.ne.s32.totalorder %s35, %s38
      %p44 = scmp.eq.s32.totalorder %s11, 0
      %p45 = por %p43, %p44
      %p46 = scmp.ne.s32.totalorder %s35, %s38
      %p47 = scmp.eq.s32.totalorder %s16, 1
      %p48 = por %p46, %p47
      %p49 = scmp.ne.s32.totalorder %s38, %s39
      %p50 = scmp.eq.s32.totalorder %s16, 0
      %p51 = por %p49, %p50
      %p52 = scmp.ne.s32.totalorder %s38, %s39
      %p53 = scmp.eq.s32.totalorder %s17, 1
      %p54 = por %p52, %p53
      %p56 = scmp.ne.s32.totalorder %s39, %s55
      %p57 = scmp.eq.s32.totalorder %s17, 0
      %p58 = por %p56, %p57
      %s59 = ssub.s32 %s18, %s30
      %s60 = ssub.s32 %s19, %s26
      %s61 = sor.u32 %s59, %s60
      %p62 = scmp.eq.s32.totalorder %s61, 0
      %s64 = sadd.s32 %s63, 1
      %s65 = scalar_select %p62, %s63, %s64
      %p68 = pneg %p62
      %p69 = scmp.eq.s32.totalorder %s11, 1
      %p70 = por %p68, %p69
      %p71 = scmp.ne.s32.totalorder %s63, %s66
      %p72 = scmp.eq.s32.totalorder %s11, 0
      %p73 = por %p71, %p72
      %p74 = scmp.ne.s32.totalorder %s63, %s66
      %p75 = scmp.eq.s32.totalorder %s16, 1
      %p76 = por %p74, %p75
      %p77 = scmp.ne.s32.totalorder %s66, %s67
      %p78 = scmp.eq.s32.totalorder %s16, 0
      %p79 = por %p77, %p78
      %p80 = scmp.ne.s32.totalorder %s66, %s67
      %p81 = scmp.eq.s32.totalorder %s17, 1
      %p82 = por %p80, %p81
      %p84 = scmp.ne.s32.totalorder %s67, %s83
      %p85 = scmp.eq.s32.totalorder %s17, 0
      %p86 = por %p84, %p85
      %s88 = sadd.s32 %s87, 1
      %p91 = scmp.eq.s32.totalorder %s11, 1
      %p92 = scmp.ne.s32.totalorder %s87, %s89
      %p93 = scmp.eq.s32.totalorder %s11, 0
      %p94 = por %p92, %p93
      %p95 = scmp.ne.s32.totalorder %s87, %s89
      %p96 = scmp.eq.s32.totalorder %s16, 1
      %p97 = por %p95, %p96
      %p98 = scmp.ne.s32.totalorder %s89, %s90
      %p99 = scmp.eq.s32.totalorder %s16, 0
      %p100 = por %p98, %p99
      %p101 = scmp.ne.s32.totalorder %s89, %s90
      %p102 = scmp.eq.s32.totalorder %s17, 1
      %p103 = por %p101, %p102
      %p105 = scmp.ne.s32.totalorder %s90, %s104
      %p106 = scmp.eq.s32.totalorder %s17, 0
      %p107 = por %p105, %p106
      %s109 = sadd.s32 %s108, 1
      %p112 = scmp.eq.s32.totalorder %s11, 1
      %p113 = scmp.ne.s32.totalorder %s108, %s110
      %p114 = scmp.eq.s32.totalorder %s11, 0
      %p115 = por %p113, %p114
      %p116 = scmp.ne.s32.totalorder %s108, %s110
      %p117 = scmp.eq.s32.totalorder %s16, 1
      %p118 = por %p116, %p117
      %p119 = scmp.ne.s32.totalorder %s110, %s111
      %p120 = scmp.eq.s32.totalorder %s16, 0
      %p121 = por %p119, %p120
      %p122 = scmp.ne.s32.totalorder %s110, %s111
      %p123 = scmp.eq.s32.totalorder %s17, 1
      %p124 = por %p122, %p123
      %p126 = scmp.ne.s32.totalorder %s111, %s125
      %p127 = scmp.eq.s32.totalorder %s17, 0
      %p128 = por %p126, %p127
      %s129 = ssub.s32 %s18, %s30
      %s130 = ssub.s32 %s19, %s26
      %s131 = sor.u32 %s129, %s130
      %p132 = scmp.eq.s32.totalorder %s131, 0
      %s134 = sadd.s32 %s133, 1
      %s135 = scalar_select %p132, %s133, %s134
      %p138 = pneg %p132
      %p139 = scmp.eq.s32.totalorder %s11, 1
      %p140 = por %p138, %p139
      %p141 = scmp.ne.s32.totalorder %s133, %s136
      %p142 = scmp.eq.s32.totalorder %s11, 0
      %p143 = por %p141, %p142
      %p144 = scmp.ne.s32.totalorder %s133, %s136
      %p145 = scmp.eq.s32.totalorder %s16, 1
      %p146 = por %p144, %p145
      %p147 = scmp.ne.s32.totalorder %s136, %s137
      %p148 = scmp.eq.s32.totalorder %s16, 0
      %p149 = por %p147, %p148
      %p150 = scmp.ne.s32.totalorder %s136, %s137
      %p151 = scmp.eq.s32.totalorder %s17, 1
      %p152 = por %p150, %p151
      %p154 = scmp.ne.s32.totalorder %s137, %s153
      %p155 = scmp.eq.s32.totalorder %s17, 0
      %p156 = por %p154, %p155
      %p157 = scmp.le.s32.totalorder 1, %s11
      %p158 = scmp.lt.s32.totalorder %s11, 3
      %p159 = pnand %p157, %p158
      %p160 = pneg %p159
      // Predicated region
      $region9: #{tpu_custom_call.1} parent=5 // pred_check
        _
      $region10: #{tpu_custom_call.1} parent=5 // pred_check_branch
        %162 = sbr.rel (%p159) target = $region12
      $region11: #{tpu_custom_call.1} parent=5 // pred_region
        %s163 = ssub.s32 %s11, 1
        // Predicated region
        $region13: #{tpu_custom_call.1} parent=11 // pred_check
          %p164 = pneg %p100
        $region14: #{tpu_custom_call.1} parent=11 // pred_check_branch
          %166 = sbr.rel (%p164) target = $region16
        $region15: #{tpu_custom_call.1} parent=11 // pred_region
          %168 = vsyncadd [#allocation3], 0
          %s169 = sshll.u32 %s2, 4
          %s170 = int_to_ptr.hbm [resolvable:$true] %s169
          %s171 = sshll.u32 [#allocation2], 4
          %s172 = int_to_ptr.vmem [resolvable:$true] %s171
          %177 = dma.hbm_to_vmem [thread:$0]  %s170, 8192, %s172, [#allocation3], 512, 512, 32
        $region16: #{tpu_custom_call.1} parent=11 // pred_fallthru
          _
        // Predicated region
        $region17: #{tpu_custom_call.1} parent=11 // pred_check
          %p178 = pneg %p121
        $region18: #{tpu_custom_call.1} parent=11 // pred_check_branch
          %180 = sbr.rel (%p178) target = $region20
        $region19: #{tpu_custom_call.1} parent=11 // pred_region
          _
        $region20: #{tpu_custom_call.1} parent=11 // pred_fallthru
          _
      $region12: #{tpu_custom_call.1} parent=5 // pred_fallthru
        _
      %p181 = scmp.lt.s32.totalorder %s11, 2
      // Predicated region
      $region21: #{tpu_custom_call.1} parent=5 // pred_check
        %p182 = pneg %p181
      $region22: #{tpu_custom_call.1} parent=5 // pred_check_branch
        %184 = sbr.rel (%p182) target = $region24
      $region23: #{tpu_custom_call.1} parent=5 // pred_region
        // Predicated region
        $region25: #{tpu_custom_call.1} parent=23 // pred_check
          %p185 = pneg %p45
        $region26: #{tpu_custom_call.1} parent=23 // pred_check_branch
          %187 = sbr.rel (%p185) target = $region28
        $region27: #{tpu_custom_call.1} parent=23 // pred_region
          %s188 = smul.u32 2, %s19
          %p189 = scmp.lt.s32.totalorder %s18, 1
          %s190 = scalar_select %p189, %s18, 1
          %p191 = scmp.lt.s32.totalorder %s188, 1
          %s192 = scalar_select %p191, %s188, 1
          %s193 = smul.addr %s190, 2
          %s194 = sadd.s32 %s192, %s193
          %s195 = smul.addr %s194, 8
          %s196 = scalar_lea.vmem %s0, %s195
          %s197 = smul.u32 2, %s19
        $region28: #{tpu_custom_call.1} parent=23 // pred_fallthru
          _
        // Predicated region
        $region29: #{tpu_custom_call.1} parent=23 // pred_check
          %p198 = pneg %p73
        $region30: #{tpu_custom_call.1} parent=23 // pred_check_branch
          %200 = sbr.rel (%p198) target = $region32
        $region31: #{tpu_custom_call.1} parent=23 // pred_region
          %p201 = scmp.lt.s32.totalorder %s18, 1
          %s202 = scalar_select %p201, %s18, 1
          %p203 = scmp.lt.s32.totalorder %s19, 0
          %s204 = scalar_select %p203, %s19, 0
          %s205 = sadd.s32 %s204, %s202
          %s206 = smul.addr %s205, 2
          %s207 = scalar_lea.vmem %s1, %s206
        $region32: #{tpu_custom_call.1} parent=23 // pred_fallthru
          _
      $region24: #{tpu_custom_call.1} parent=5 // pred_fallthru
        _
      %p208 = scmp.le.s32.totalorder 1, %s11
      %p209 = scmp.lt.s32.totalorder %s11, 3
      %p210 = pnand %p208, %p209
      %p211 = pneg %p210
      // Predicated region
      $region33: #{tpu_custom_call.1} parent=5 // pred_check
        _
      $region34: #{tpu_custom_call.1} parent=5 // pred_check_branch
        %213 = sbr.rel (%p210) target = $region36
      $region35: #{tpu_custom_call.1} parent=5 // pred_region
        %s214 = ssub.s32 %s11, 1
        // Predicated region
        $region37: #{tpu_custom_call.1} parent=35 // pred_check
          %p215 = pneg %p100
        $region38: #{tpu_custom_call.1} parent=35 // pred_check_branch
          %217 = sbr.rel (%p215) target = $region40
        $region39: #{tpu_custom_call.1} parent=35 // pred_region
          %219 = dma.done [#allocation3], 8192
        $region40: #{tpu_custom_call.1} parent=35 // pred_fallthru
          _
        %s220 = smul.u32 2, %s21
        %p221 = scmp.lt.s32.totalorder %s20, 1
        %s222 = scalar_select %p221, %s20, 1
        %p223 = scmp.lt.s32.totalorder %s220, 1
        %s224 = scalar_select %p223, %s220, 1
        %s225 = smul.addr %s222, 2
        %s226 = sadd.s32 %s224, %s225
        %s227 = smul.addr %s226, 8
        %s228 = scalar_lea.vmem %s0, %s227
        %p229 = pneg %p51
        %p230 = pneg %p48
        %p231 = scmp.lt.s32.totalorder %s20, 1
        %s232 = scalar_select %p231, %s20, 1
        %p233 = scmp.lt.s32.totalorder %s21, 0
        %s234 = scalar_select %p233, %s21, 0
        %s235 = sadd.s32 %s234, %s232
        %s236 = smul.addr %s235, 2
        %s237 = scalar_lea.vmem %s1, %s236
        %p238 = pneg %p79
        %p239 = pneg %p76
        %p240 = pneg %p100
        %p241 = pneg %p97
        %p242 = pneg %p121
        %p243 = pneg %p118
        %p244 = pneg %p149
        %p245 = pneg %p146
        %s246 = smul.u32 2, %s21
        %p247 = scmp.lt.s32.totalorder %s20, 1
        %s248 = scalar_select %p247, %s20, 1
        %p249 = scmp.lt.s32.totalorder %s246, 1
        %s250 = scalar_select %p249, %s246, 1
        %s251 = smul.addr %s248, 2
        %s252 = sadd.s32 %s250, %s251
        %s253 = smul.addr %s252, 8
        %s254 = scalar_lea.vmem %s4, %s253
        %s255 = smul.u32 2, %s21
        %p256 = scmp.lt.s32.totalorder %s20, 1
        %s257 = scalar_select %p256, %s20, 1
        %p258 = scmp.lt.s32.totalorder %s255, 1
        %s259 = scalar_select %p258, %s255, 1
        %s260 = smul.addr %s257, 2
        %s261 = sadd.s32 %s259, %s260
        %s262 = smul.addr %s261, 8
        %s263 = scalar_lea.vmem %s0, %s262
        %s264 = smul.u32 2, %s21
        %p265 = scmp.lt.s32.totalorder %s20, 1
        %s266 = scalar_select %p265, %s20, 1
        %p267 = scmp.lt.s32.totalorder %s21, 0
        %s268 = scalar_select %p267, %s21, 0
        %s269 = sadd.s32 %s268, %s266
        %s270 = smul.addr %s269, 2
        %s271 = scalar_lea.vmem %s1, %s270
        %s272 = smul.u32 2, %s21
        %p273 = scmp.lt.s32.totalorder %s20, 1
        %s274 = scalar_select %p273, %s20, 1
        %p275 = scmp.lt.s32.totalorder %s272, 1
        %s276 = scalar_select %p275, %s272, 1
        %s277 = smul.addr %s274, 2
        %s278 = sadd.s32 %s276, %s277
        %s279 = smul.addr %s278, 8
        %s280 = scalar_lea.vmem %s4, %s279
        %s281 = smul.u32 2, %s21
        %v282 = vld [vmem:[%s263] sm:$0xff]
        %v283 = vld [vmem:[%s263 + $0x8] sm:$0xff]
        %v284 = vld [vmem:[%s271] sm:$0x3]
        %vm285 = vcmask 31744
        %v286 = vsel %vm285, %v282, 0.0
        %v287 = vsel %vm285, %v283, 0.0
        %v288 = vsel %vm285, %v284, 0.0
        %v289 = vld [vmem:[#allocation2] sm:$0xff]
        %v290 = vld [vmem:[#allocation2 + $0x8] sm:$0xff]
        %v291 = vld [vmem:[#allocation2 + $0x10] sm:$0xff]
        %v292 = vld [vmem:[#allocation2 + $0x18] sm:$0xff]
        %v293 = vld [vmem:[#allocation2 + $0x20] sm:$0xff]
        %v294 = vld [vmem:[#allocation2 + $0x28] sm:$0xff]
        %v295 = vld [vmem:[#allocation2 + $0x30] sm:$0xff]
        %v296 = vld [vmem:[#allocation2 + $0x38] sm:$0xff]
        %v297 = vld [vmem:[#allocation2 + $0x40] sm:$0xff]
        %v298 = vld [vmem:[#allocation2 + $0x48] sm:$0xff]
        %v299 = vld [vmem:[#allocation2 + $0x50] sm:$0xff]
        %v300 = vld [vmem:[#allocation2 + $0x58] sm:$0xff]
        %v301 = vld [vmem:[#allocation2 + $0x60] sm:$0xff]
        %v302 = vld [vmem:[#allocation2 + $0x68] sm:$0xff]
        %v303 = vld [vmem:[#allocation2 + $0x70] sm:$0xff]
        %v304 = vld [vmem:[#allocation2 + $0x78] sm:$0xff]
        %v305 = vld [vmem:[#allocation2 + $0x80] sm:$0xff]
        %v306 = vld [vmem:[#allocation2 + $0x88] sm:$0xff]
        %v307 = vld [vmem:[#allocation2 + $0x90] sm:$0xff]
        %v308 = vld [vmem:[#allocation2 + $0x98] sm:$0xff]
        %v309 = vld [vmem:[#allocation2 + $0xa0] sm:$0xff]
        %v310 = vld [vmem:[#allocation2 + $0xa8] sm:$0xff]
        %v311 = vld [vmem:[#allocation2 + $0xb0] sm:$0xff]
        %v312 = vld [vmem:[#allocation2 + $0xb8] sm:$0xff]
        %v313 = vld [vmem:[#allocation2 + $0xc0] sm:$0xff]
        %v314 = vld [vmem:[#allocation2 + $0xc8] sm:$0xff]
        %v315 = vld [vmem:[#allocation2 + $0xd0] sm:$0xff]
        %v316 = vld [vmem:[#allocation2 + $0xd8] sm:$0xff]
        %v317 = vld [vmem:[#allocation2 + $0xe0] sm:$0xff]
        %v318 = vld [vmem:[#allocation2 + $0xe8] sm:$0xff]
        %v319 = vld [vmem:[#allocation2 + $0xf0] sm:$0xff]
        %v320 = vld [vmem:[#allocation2 + $0xf8] sm:$0xff]
        %v321 = vld [vmem:[#allocation2 + $0x100] sm:$0xff]
        %v322 = vld [vmem:[#allocation2 + $0x108] sm:$0xff]
        %v323 = vld [vmem:[#allocation2 + $0x110] sm:$0xff]
        %v324 = vld [vmem:[#allocation2 + $0x118] sm:$0xff]
        %v325 = vld [vmem:[#allocation2 + $0x120] sm:$0xff]
        %v326 = vld [vmem:[#allocation2 + $0x128] sm:$0xff]
        %v327 = vld [vmem:[#allocation2 + $0x130] sm:$0xff]
        %v328 = vld [vmem:[#allocation2 + $0x138] sm:$0xff]
        %v329 = vld [vmem:[#allocation2 + $0x140] sm:$0xff]
        %v330 = vld [vmem:[#allocation2 + $0x148] sm:$0xff]
        %v331 = vld [vmem:[#allocation2 + $0x150] sm:$0xff]
        %v332 = vld [vmem:[#allocation2 + $0x158] sm:$0xff]
        %v333 = vld [vmem:[#allocation2 + $0x160] sm:$0xff]
        %v334 = vld [vmem:[#allocation2 + $0x168] sm:$0xff]
        %v335 = vld [vmem:[#allocation2 + $0x170] sm:$0xff]
        %v336 = vld [vmem:[#allocation2 + $0x178] sm:$0xff]
        %v337 = vld [vmem:[#allocation2 + $0x180] sm:$0xff]
        %v338 = vld [vmem:[#allocation2 + $0x188] sm:$0xff]
        %v339 = vld [vmem:[#allocation2 + $0x190] sm:$0xff]
        %v340 = vld [vmem:[#allocation2 + $0x198] sm:$0xff]
        %v341 = vld [vmem:[#allocation2 + $0x1a0] sm:$0xff]
        %v342 = vld [vmem:[#allocation2 + $0x1a8] sm:$0xff]
        %v343 = vld [vmem:[#allocation2 + $0x1b0] sm:$0xff]
        %v344 = vld [vmem:[#allocation2 + $0x1b8] sm:$0xff]
        %v345 = vld [vmem:[#allocation2 + $0x1c0] sm:$0xff]
        %v346 = vld [vmem:[#allocation2 + $0x1c8] sm:$0xff]
        %v347 = vld [vmem:[#allocation2 + $0x1d0] sm:$0xff]
        %v348 = vld [vmem:[#allocation2 + $0x1d8] sm:$0xff]
        %v349 = vld [vmem:[#allocation2 + $0x1e0] sm:$0xff]
        %v350 = vld [vmem:[#allocation2 + $0x1e8] sm:$0xff]
        %v351 = vld [vmem:[#allocation2 + $0x1f0] sm:$0xff]
        %v352 = vld [vmem:[#allocation2 + $0x1f8] sm:$0xff]
        %353 = vmatpush.msra.mxu0 %v349
        %354 = vmatpush.msra.mxu0 %v345
        %355 = vmatpush.msra.mxu0 %v341
        %356 = vmatpush.msra.mxu0 %v337
        %357 = vmatpush.msra.mxu0 %v333
        %358 = vmatpush.msra.mxu0 %v329
        %359 = vmatpush.msra.mxu0 %v325
        %360 = vmatpush.msra.mxu0 %v321
        %361 = vmatpush.msra.mxu0 %v317
        %362 = vmatpush.msra.mxu0 %v313
        %363 = vmatpush.msra.mxu0 %v309
        %364 = vmatpush.msra.mxu0 %v305
        %365 = vmatpush.msra.mxu0 %v301
        %366 = vmatpush.msra.mxu0 %v297
        %367 = vmatpush.msra.mxu0 %v293
        %368 = vmatpush.msra.mxu0 %v289
        %369 = vmatmul.f32.gmra.mxu0 %v286
        %v370 = vpop.f32.mrf.mxu0
        %v371 = vadd.f32 0.0, %v370
        %372 = vmatmul.f32.gmra.mxu0 %v287
        %v373 = vpop.f32.mrf.mxu0
        %v374 = vadd.f32 0.0, %v373
        %375 = vdwg.mxu0
        %376 = vmatpush.msra.mxu0 %v350
        %377 = vmatpush.msra.mxu0 %v346
        %378 = vmatpush.msra.mxu0 %v342
        %379 = vmatpush.msra.mxu0 %v338
        %380 = vmatpush.msra.mxu0 %v334
        %381 = vmatpush.msra.mxu0 %v330
        %382 = vmatpush.msra.mxu0 %v326
        %383 = vmatpush.msra.mxu0 %v322
        %384 = vmatpush.msra.mxu0 %v318
        %385 = vmatpush.msra.mxu0 %v314
        %386 = vmatpush.msra.mxu0 %v310
        %387 = vmatpush.msra.mxu0 %v306
        %388 = vmatpush.msra.mxu0 %v302
        %389 = vmatpush.msra.mxu0 %v298
        %390 = vmatpush.msra.mxu0 %v294
        %391 = vmatpush.msra.mxu0 %v290
        %392 = vmatmul.f32.gmra.mxu0 %v286
        %v393 = vpop.f32.mrf.mxu0
        %v394 = vadd.f32 0.0, %v393
        %395 = vmatmul.f32.gmra.mxu0 %v287
        %v396 = vpop.f32.mrf.mxu0
        %v397 = vadd.f32 0.0, %v396
        %398 = vdwg.mxu0
        %399 = vmatpush.msra.mxu0 %v351
        %400 = vmatpush.msra.mxu0 %v347
        %401 = vmatpush.msra.mxu0 %v343
        %402 = vmatpush.msra.mxu0 %v339
        %403 = vmatpush.msra.mxu0 %v335
        %404 = vmatpush.msra.mxu0 %v331
        %405 = vmatpush.msra.mxu0 %v327
        %406 = vmatpush.msra.mxu0 %v323
        %407 = vmatpush.msra.mxu0 %v319
        %408 = vmatpush.msra.mxu0 %v315
        %409 = vmatpush.msra.mxu0 %v311
        %410 = vmatpush.msra.mxu0 %v307
        %411 = vmatpush.msra.mxu0 %v303
        %412 = vmatpush.msra.mxu0 %v299
        %413 = vmatpush.msra.mxu0 %v295
        %414 = vmatpush.msra.mxu0 %v291
        %415 = vmatmul.f32.gmra.mxu0 %v286
        %v416 = vpop.f32.mrf.mxu0
        %v417 = vadd.f32 0.0, %v416
        %418 = vmatmul.f32.gmra.mxu0 %v287
        %v419 = vpop.f32.mrf.mxu0
        %v420 = vadd.f32 0.0, %v419
        %421 = vdwg.mxu0
        %422 = vmatpush.msra.mxu0 %v352
        %423 = vmatpush.msra.mxu0 %v348
        %424 = vmatpush.msra.mxu0 %v344
        %425 = vmatpush.msra.mxu0 %v340
        %426 = vmatpush.msra.mxu0 %v336
        %427 = vmatpush.msra.mxu0 %v332
        %428 = vmatpush.msra.mxu0 %v328
        %429 = vmatpush.msra.mxu0 %v324
        %430 = vmatpush.msra.mxu0 %v320
        %431 = vmatpush.msra.mxu0 %v316
        %432 = vmatpush.msra.mxu0 %v312
        %433 = vmatpush.msra.mxu0 %v308
        %434 = vmatpush.msra.mxu0 %v304
        %435 = vmatpush.msra.mxu0 %v300
        %436 = vmatpush.msra.mxu0 %v296
        %437 = vmatpush.msra.mxu0 %v292
        %438 = vmatmul.f32.gmra.mxu0 %v286
        %v439 = vpop.f32.mrf.mxu0
        %v440 = vadd.f32 0.0, %v439
        %441 = vmatmul.f32.gmra.mxu0 %v287
        %v442 = vpop.f32.mrf.mxu0
        %v443 = vadd.f32 0.0, %v442
        %444 = vdwg.mxu0
        %445 = vmatpush.msra.mxu0 %v349
        %446 = vmatpush.msra.mxu0 %v345
        %447 = vmatpush.msra.mxu0 %v341
        %448 = vmatpush.msra.mxu0 %v337
        %449 = vmatpush.msra.mxu0 %v333
        %450 = vmatpush.msra.mxu0 %v329
        %451 = vmatpush.msra.mxu0 %v325
        %452 = vmatpush.msra.mxu0 %v321
        %453 = vmatpush.msra.mxu0 %v317
        %454 = vmatpush.msra.mxu0 %v313
        %455 = vmatpush.msra.mxu0 %v309
        %456 = vmatpush.msra.mxu0 %v305
        %457 = vmatpush.msra.mxu0 %v301
        %458 = vmatpush.msra.mxu0 %v297
        %459 = vmatpush.msra.mxu0 %v293
        %460 = vmatpush.msra.mxu0 %v289
        %461 = vmatmul.f32.gmra.mxu0 %v288
        %v462 = vpop.f32.mrf.mxu0
        %v463 = vadd.f32 0.0, %v462
        %464 = vdwg.mxu0
        %465 = vmatpush.msra.mxu0 %v352
        %466 = vmatpush.msra.mxu0 %v348
        %467 = vmatpush.msra.mxu0 %v344
        %468 = vmatpush.msra.mxu0 %v340
        %469 = vmatpush.msra.mxu0 %v336
        %470 = vmatpush.msra.mxu0 %v332
        %471 = vmatpush.msra.mxu0 %v328
        %472 = vmatpush.msra.mxu0 %v324
        %473 = vmatpush.msra.mxu0 %v320
        %474 = vmatpush.msra.mxu0 %v316
        %475 = vmatpush.msra.mxu0 %v312
        %476 = vmatpush.msra.mxu0 %v308
        %477 = vmatpush.msra.mxu0 %v304
        %478 = vmatpush.msra.mxu0 %v300
        %479 = vmatpush.msra.mxu0 %v296
        %480 = vmatpush.msra.mxu0 %v292
        %481 = vmatmul.f32.gmra.mxu0 %v288
        %v482 = vpop.f32.mrf.mxu0
        %v483 = vadd.f32 0.0, %v482
        %484 = vdwg.mxu0
        %v485 = vlaneseq
        %v486 = vshrl.u32 %v485, 7
        %v487 = vadd.s32 %v486, 8
        %vm488 = vcmp.eq.s32.totalorder %v486, 0
        %vm489 = vcmp.eq.s32.totalorder %v487, 0
        %v490 = vrot.slane %v371, 7
        %v491 = vrot.slane %v374, 7
        %vm492 = vcmp.lt.s32.totalorder %v486, 1
        %v493 = vsel %vm492, %v490, %v491
        %v494 = vsel %vm492, %v491, %v490
        %v495 = vsel %vm488, 1, 0
        %v496 = vsel %vm489, 1, 0
        %vm497 = vcmp.eq.s32.totalorder %v495, 1
        %vm498 = vcmp.eq.s32.totalorder %v496, 1
        %v499 = vperm.slane %v463, 0
        %v500 = vsel %vm497, %v499, %v494
        %v501 = vsel %vm498, %v499, %v493
        %vm502 = vcmp.eq.s32.totalorder %v486, 15
        %vm503 = vcmp.eq.s32.totalorder %v487, 15
        %v504 = vrot.slane %v440, 1
        %v505 = vrot.slane %v443, 1
        %vm506 = vcmp.lt.s32.totalorder %v486, 7
        %v507 = vsel %vm506, %v504, %v505
        %v508 = vsel %vm506, %v505, %v504
        %v509 = vsel %vm502, 1, 0
        %v510 = vsel %vm503, 1, 0
        %vm511 = vcmp.eq.s32.totalorder %v509, 1
        %vm512 = vcmp.eq.s32.totalorder %v510, 1
        %v513 = vperm.slane %v483, 1
        %v514 = vsel %vm511, %v513, %v507
        %v515 = vsel %vm512, %v513, %v508
        %v516 = vld [vmem:[%s3] sm:$0x1]
        %v517 = vadd.f32 %v500, %v394
        %v518 = vadd.f32 %v501, %v397
        %v520 = vperm.slane %v516, 0
        %v522 = vadd.f32 %v517, %v520
        %v523 = vadd.f32 %v518, %v520
        %v524 = vadd.f32 %v417, %v514
        %v525 = vadd.f32 %v420, %v515
        %v526 = vadd.f32 %v524, %v520
        %v527 = vadd.f32 %v525, %v520
        %530 = vrot.lane.b32.xlu0 %v526, 4
        %v531 = vpop.permute.xlu0 %530
        %532 = vrot.lane.b32.xlu0 %v527, 4
        %v533 = vpop.permute.xlu0 %532
        %v536 = vsel %vm285, %v522, %v531
        %v537 = vsel %vm285, %v523, %v533
        %vm538 = vcmask 64512
        %539 = vst.msk [vmem:[%s280] sm:$0xff] %vm538, %v536
        %540 = vst.msk [vmem:[%s280 + $0x8] sm:$0xff] %vm538, %v537
        %s541 = smul.u32 2, %s21
        %p542 = scmp.lt.s32.totalorder %s20, 1
        %s543 = scalar_select %p542, %s20, 1
        %p544 = scmp.lt.s32.totalorder %s541, 1
        %s545 = scalar_select %p544, %s541, 1
        %s546 = smul.addr %s543, 2
        %s547 = sadd.s32 %s545, %s546
        %s548 = smul.addr %s547, 8
        %s549 = scalar_lea.vmem %s4, %s548
        // Predicated region
        $region41: #{tpu_custom_call.1} parent=35 // pred_check
          %p550 = pneg %p146
        $region42: #{tpu_custom_call.1} parent=35 // pred_check_branch
          %552 = sbr.rel (%p550) target = $region44
        $region43: #{tpu_custom_call.1} parent=35 // pred_region
          %s553 = smul.u32 2, %s21
        $region44: #{tpu_custom_call.1} parent=35 // pred_fallthru
          _
      $region36: #{tpu_custom_call.1} parent=5 // pred_fallthru
        _
      %p554 = scmp.le.s32.totalorder 2, %s11
      // Predicated region
      $region45: #{tpu_custom_call.1} parent=5 // pred_check
        %p555 = pneg %p554
      $region46: #{tpu_custom_call.1} parent=5 // pred_check_branch
        %557 = sbr.rel (%p555) target = $region48
      $region47: #{tpu_custom_call.1} parent=5 // pred_region
        %s558 = ssub.s32 %s11, 2
        // Predicated region
        $region49: #{tpu_custom_call.1} parent=47 // pred_check
          %p559 = pneg %p152
        $region50: #{tpu_custom_call.1} parent=47 // pred_check_branch
          %561 = sbr.rel (%p559) target = $region52
        $region51: #{tpu_custom_call.1} parent=47 // pred_region
          %s562 = smul.u32 2, %s23
          %p563 = scmp.lt.s32.totalorder %s22, 1
          %s564 = scalar_select %p563, %s22, 1
          %p565 = scmp.lt.s32.totalorder %s562, 1
          %s566 = scalar_select %p565, %s562, 1
          %s567 = smul.addr %s564, 2
          %s568 = sadd.s32 %s566, %s567
          %s569 = smul.addr %s568, 8
          %s570 = scalar_lea.vmem %s4, %s569
        $region52: #{tpu_custom_call.1} parent=47 // pred_fallthru
          _
      $region48: #{tpu_custom_call.1} parent=5 // pred_fallthru
        _
    $region6: #{tpu_custom_call.1} parent=1 // loop_footer
      %s15 = sadd.s32 1, %s11
    $region7: #{tpu_custom_call.1} parent=1 // loop_footer_branch
      %10 = sbr.rel target = $region3
    $region8: #{tpu_custom_call.1} parent=1 // loop_exit
      _
    %571 = vsyncpa [#allocation3], 1
    %s572 = scalar_lea.sflag [#allocation3], 1
    %573 = vsyncpa %s572, 1

// kernel: tpu_custom_call.1
$region0: #{tpu_custom_call.1}
  #allocation0 [shape = 'u32[]', space=smem, size = 0x4, offset = 0x4, fixed_abs, tag = 'smem constant byte address 0x4 - core index']
  #allocation1 [shape = 'u32[72,128]{1,0:T(1,128)}', space=vmem, size = 0x9000, scoped, tag = 'internal scratch']
  %s0 = inlined_call_operand.vmem [shape: f32[2,16,4], index: 0, kind: input, shape index: {}]
  %s1 = inlined_call_operand.vmem [shape: f32[2,1,2,4], index: 1, kind: input, shape index: {}]
  %s2 = inlined_call_operand.hbm [shape: f32[128,512], index: 2, kind: input, shape index: {}]
  %s3 = inlined_call_operand.vmem [shape: f32[1,128], index: 3, kind: input, shape index: {}]
  %s4 = inlined_call_operand.vmem [shape: f32[2,16,8], index: 4, kind: output, shape index: {}]
  %s5 = sld [smem:[#allocation0]]
  $region53: #{tpu_custom_call.1} parent=0
    _
  %s7 = ssub.s32 1, %s5
  %s8 = scalar_select 0, %s7, %s5
  $region1: #{tpu_custom_call.1} parent=0
    #allocation2 [shape = 'u8[262144]{0}', space=vmem, size = 0x40000, scoped, tag = 'input window, operand 2, single buffered']
    #allocation3 [shape = 's32[2]{0}', space=sflag, size = 0x8, scoped, tag = 'scoped memory for tpu_custom_call.1']
    %9 = vsyncpa [#allocation3], 0
    loop: start=0, step=1, limit=4
    $region2: #{tpu_custom_call.1} parent=1 // loop_pre_header
      _
    $region3: #{tpu_custom_call.1} parent=1 // loop_header
      %s11 = sphi 0, %s15
      %p12 = scmp.ge.s32.totalorder %s11, 4
      %s18 = sphi 0, %s30
      %s19 = sphi 0, %s26
      %s20 = sphi 0, %s18
      %s21 = sphi 0, %s19
      %s22 = sphi 0, %s20
      %s23 = sphi 0, %s21
      %s35 = sphi 0, %s37
      %s38 = sphi 0, %s35
      %s39 = sphi 0, %s38
      %s55 = sphi 0, %s39
      %s63 = sphi 0, %s65
      %s66 = sphi 0, %s63
      %s67 = sphi 0, %s66
      %s83 = sphi 0, %s67
      %s87 = sphi 0, %s87
      %s89 = sphi 0, %s87
      %s90 = sphi 0, %s89
      %s104 = sphi 0, %s90
      %s108 = sphi 0, %s108
      %s110 = sphi 0, %s108
      %s111 = sphi 0, %s110
      %s125 = sphi 0, %s111
      %s133 = sphi 0, %s135
      %s136 = sphi 0, %s133
      %s137 = sphi 0, %s136
      %s153 = sphi 0, %s137
    $region4: #{tpu_custom_call.1} parent=1 // loop_header_branch
      %14 = sbr.rel (%p12) target = $region8
    $region5: #{tpu_custom_call.1} parent=1 // loop_body
      %s16 = ssub.s32 %s11, 1
      %s17 = ssub.s32 %s11, 2
      %s24 = sadd.s32 1, %s19
      %p25 = scmp.ge.s32.totalorder %s24, 1
      %s26 = scalar_select %p25, 0, %s24
      %s27 = sadd.s32 1, %s18
      %s28 = scalar_select %p25, %s27, %s18
      %p29 = scmp.ge.s32.totalorder %s28, 2
      %s30 = scalar_select %p29, 0, %s28
      %s31 = ssub.s32 %s18, %s30
      %s32 = ssub.s32 %s19, %s26
      %s33 = sor.u32 %s31, %s32
      %p34 = scmp.eq.s32.totalorder %s33, 0
      %s36 = sadd.s32 %s35, 1
      %s37 = scalar_select %p34, %s35, %s36
      %p40 = pneg %p34
      %p41 = scmp.eq.s32.totalorder %s11, 1
      %p42 = por %p40, %p41
      %p43 = scmp.ne.s32.totalorder %s35, %s38
      %p44 = scmp.eq.s32.totalorder %s11, 0
      %p45 = por %p43, %p44
      %p46 = scmp.ne.s32.totalorder %s35, %s38
      %p47 = scmp.eq.s32.totalorder %s16, 1
      %p48 = por %p46, %p47
      %p49 = scmp.ne.s32.totalorder %s38, %s39
      %p50 = scmp.eq.s32.totalorder %s16, 0
      %p51 = por %p49, %p50
      %p52 = scmp.ne.s32.totalorder %s38, %s39
      %p53 = scmp.eq.s32.totalorder %s17, 1
      %p54 = por %p52, %p53
      %p56 = scmp.ne.s32.totalorder %s39, %s55
      %p57 = scmp.eq.s32.totalorder %s17, 0
      %p58 = por %p56, %p57
      %s59 = ssub.s32 %s18, %s30
      %s60 = ssub.s32 %s19, %s26
      %s61 = sor.u32 %s59, %s60
      %p62 = scmp.eq.s32.totalorder %s61, 0
      %s64 = sadd.s32 %s63, 1
      %s65 = scalar_select %p62, %s63, %s64
      %p68 = pneg %p62
      %p69 = scmp.eq.s32.totalorder %s11, 1
      %p70 = por %p68, %p69
      %p71 = scmp.ne.s32.totalorder %s63, %s66
      %p72 = scmp.eq.s32.totalorder %s11, 0
      %p73 = por %p71, %p72
      %p74 = scmp.ne.s32.totalorder %s63, %s66
      %p75 = scmp.eq.s32.totalorder %s16, 1
      %p76 = por %p74, %p75
      %p77 = scmp.ne.s32.totalorder %s66, %s67
      %p78 = scmp.eq.s32.totalorder %s16, 0
      %p79 = por %p77, %p78
      %p80 = scmp.ne.s32.totalorder %s66, %s67
      %p81 = scmp.eq.s32.totalorder %s17, 1
      %p82 = por %p80, %p81
      %p84 = scmp.ne.s32.totalorder %s67, %s83
      %p85 = scmp.eq.s32.totalorder %s17, 0
      %p86 = por %p84, %p85
      %s88 = sadd.s32 %s87, 1
      %p91 = scmp.eq.s32.totalorder %s11, 1
      %p92 = scmp.ne.s32.totalorder %s87, %s89
      %p93 = scmp.eq.s32.totalorder %s11, 0
      %p94 = por %p92, %p93
      %p95 = scmp.ne.s32.totalorder %s87, %s89
      %p96 = scmp.eq.s32.totalorder %s16, 1
      %p97 = por %p95, %p96
      %p98 = scmp.ne.s32.totalorder %s89, %s90
      %p99 = scmp.eq.s32.totalorder %s16, 0
      %p100 = por %p98, %p99
      %p101 = scmp.ne.s32.totalorder %s89, %s90
      %p102 = scmp.eq.s32.totalorder %s17, 1
      %p103 = por %p101, %p102
      %p105 = scmp.ne.s32.totalorder %s90, %s104
      %p106 = scmp.eq.s32.totalorder %s17, 0
      %p107 = por %p105, %p106
      %s109 = sadd.s32 %s108, 1
      %p112 = scmp.eq.s32.totalorder %s11, 1
      %p113 = scmp.ne.s32.totalorder %s108, %s110
      %p114 = scmp.eq.s32.totalorder %s11, 0
      %p115 = por %p113, %p114
      %p116 = scmp.ne.s32.totalorder %s108, %s110
      %p117 = scmp.eq.s32.totalorder %s16, 1
      %p118 = por %p116, %p117
      %p119 = scmp.ne.s32.totalorder %s110, %s111
      %p120 = scmp.eq.s32.totalorder %s16, 0
      %p121 = por %p119, %p120
      %p122 = scmp.ne.s32.totalorder %s110, %s111
      %p123 = scmp.eq.s32.totalorder %s17, 1
      %p124 = por %p122, %p123
      %p126 = scmp.ne.s32.totalorder %s111, %s125
      %p127 = scmp.eq.s32.totalorder %s17, 0
      %p128 = por %p126, %p127
      %s129 = ssub.s32 %s18, %s30
      %s130 = ssub.s32 %s19, %s26
      %s131 = sor.u32 %s129, %s130
      %p132 = scmp.eq.s32.totalorder %s131, 0
      %s134 = sadd.s32 %s133, 1
      %s135 = scalar_select %p132, %s133, %s134
      %p138 = pneg %p132
      %p139 = scmp.eq.s32.totalorder %s11, 1
      %p140 = por %p138, %p139
      %p141 = scmp.ne.s32.totalorder %s133, %s136
      %p142 = scmp.eq.s32.totalorder %s11, 0
      %p143 = por %p141, %p142
      %p144 = scmp.ne.s32.totalorder %s133, %s136
      %p145 = scmp.eq.s32.totalorder %s16, 1
      %p146 = por %p144, %p145
      %p147 = scmp.ne.s32.totalorder %s136, %s137
      %p148 = scmp.eq.s32.totalorder %s16, 0
      %p149 = por %p147, %p148
      %p150 = scmp.ne.s32.totalorder %s136, %s137
      %p151 = scmp.eq.s32.totalorder %s17, 1
      %p152 = por %p150, %p151
      %p154 = scmp.ne.s32.totalorder %s137, %s153
      %p155 = scmp.eq.s32.totalorder %s17, 0
      %p156 = por %p154, %p155
      %p157 = scmp.le.s32.totalorder 1, %s11
      %p158 = scmp.lt.s32.totalorder %s11, 3
      %p159 = pnand %p157, %p158
      %p160 = pneg %p159
      // Predicated region
      $region9: #{tpu_custom_call.1} parent=5 // pred_check
        _
      $region10: #{tpu_custom_call.1} parent=5 // pred_check_branch
        %162 = sbr.rel (%p159) target = $region12
      $region11: #{tpu_custom_call.1} parent=5 // pred_region
        %s163 = ssub.s32 %s11, 1
        // Predicated region
        $region13: #{tpu_custom_call.1} parent=11 // pred_check
          %p164 = pneg %p100
        $region14: #{tpu_custom_call.1} parent=11 // pred_check_branch
          %166 = sbr.rel (%p164) target = $region16
        $region15: #{tpu_custom_call.1} parent=11 // pred_region
          %168 = vsyncadd [#allocation3], 0
          %s169 = sshll.u32 %s2, 4
          %s170 = int_to_ptr.hbm [resolvable:$true] %s169
          %s171 = sshll.u32 [#allocation2], 4
          %s172 = int_to_ptr.vmem [resolvable:$true] %s171
          %177 = dma.hbm_to_vmem [thread:$0]  %s170, 8192, %s172, [#allocation3], 512, 512, 32
        $region16: #{tpu_custom_call.1} parent=11 // pred_fallthru
          _
        // Predicated region
        $region17: #{tpu_custom_call.1} parent=11 // pred_check
          %p178 = pneg %p121
        $region18: #{tpu_custom_call.1} parent=11 // pred_check_branch
          %180 = sbr.rel (%p178) target = $region20
        $region19: #{tpu_custom_call.1} parent=11 // pred_region
          _
        $region20: #{tpu_custom_call.1} parent=11 // pred_fallthru
          _
      $region12: #{tpu_custom_call.1} parent=5 // pred_fallthru
        _
      %p181 = scmp.lt.s32.totalorder %s11, 2
      // Predicated region
      $region21: #{tpu_custom_call.1} parent=5 // pred_check
        %p182 = pneg %p181
      $region22: #{tpu_custom_call.1} parent=5 // pred_check_branch
        %184 = sbr.rel (%p182) target = $region24
      $region23: #{tpu_custom_call.1} parent=5 // pred_region
        // Predicated region
        $region25: #{tpu_custom_call.1} parent=23 // pred_check
          %p185 = pneg %p45
        $region26: #{tpu_custom_call.1} parent=23 // pred_check_branch
          %187 = sbr.rel (%p185) target = $region28
        $region27: #{tpu_custom_call.1} parent=23 // pred_region
          %s188 = smul.u32 2, %s19
          %p189 = scmp.lt.s32.totalorder %s18, 1
          %s190 = scalar_select %p189, %s18, 1
          %p191 = scmp.lt.s32.totalorder %s188, 1
          %s192 = scalar_select %p191, %s188, 1
          %s193 = smul.addr %s190, 2
          %s194 = sadd.s32 %s192, %s193
          %s195 = smul.addr %s194, 8
          %s196 = scalar_lea.vmem %s0, %s195
          %s197 = smul.u32 2, %s19
        $region28: #{tpu_custom_call.1} parent=23 // pred_fallthru
          _
        // Predicated region
        $region29: #{tpu_custom_call.1} parent=23 // pred_check
          %p198 = pneg %p73
        $region30: #{tpu_custom_call.1} parent=23 // pred_check_branch
          %200 = sbr.rel (%p198) target = $region32
        $region31: #{tpu_custom_call.1} parent=23 // pred_region
          %p201 = scmp.lt.s32.totalorder %s18, 1
          %s202 = scalar_select %p201, %s18, 1
          %p203 = scmp.lt.s32.totalorder %s19, 0
          %s204 = scalar_select %p203, %s19, 0
          %s205 = sadd.s32 %s204, %s202
          %s206 = smul.addr %s205, 2
          %s207 = scalar_lea.vmem %s1, %s206
        $region32: #{tpu_custom_call.1} parent=23 // pred_fallthru
          _
      $region24: #{tpu_custom_call.1} parent=5 // pred_fallthru
        _
      %p208 = scmp.le.s32.totalorder 1, %s11
      %p209 = scmp.lt.s32.totalorder %s11, 3
      %p210 = pnand %p208, %p209
      %p211 = pneg %p210
      // Predicated region
      $region33: #{tpu_custom_call.1} parent=5 // pred_check
        _
      $region34: #{tpu_custom_call.1} parent=5 // pred_check_branch
        %213 = sbr.rel (%p210) target = $region36
      $region35: #{tpu_custom_call.1} parent=5 // pred_region
        %s214 = ssub.s32 %s11, 1
        // Predicated region
        $region37: #{tpu_custom_call.1} parent=35 // pred_check
          %p215 = pneg %p100
        $region38: #{tpu_custom_call.1} parent=35 // pred_check_branch
          %217 = sbr.rel (%p215) target = $region40
        $region39: #{tpu_custom_call.1} parent=35 // pred_region
          %219 = dma.done [#allocation3], 8192
        $region40: #{tpu_custom_call.1} parent=35 // pred_fallthru
          _
        %s220 = smul.u32 2, %s21
        %p221 = scmp.lt.s32.totalorder %s20, 1
        %s222 = scalar_select %p221, %s20, 1
        %p223 = scmp.lt.s32.totalorder %s220, 1
        %s224 = scalar_select %p223, %s220, 1
        %s225 = smul.addr %s222, 2
        %s226 = sadd.s32 %s224, %s225
        %s227 = smul.addr %s226, 8
        %s228 = scalar_lea.vmem %s0, %s227
        %p229 = pneg %p51
        %p230 = pneg %p48
        %p231 = scmp.lt.s32.totalorder %s20, 1
        %s232 = scalar_select %p231, %s20, 1
        %p233 = scmp.lt.s32.totalorder %s21, 0
        %s234 = scalar_select %p233, %s21, 0
        %s235 = sadd.s32 %s234, %s232
        %s236 = smul.addr %s235, 2
        %s237 = scalar_lea.vmem %s1, %s236
        %p238 = pneg %p79
        %p239 = pneg %p76
        %p240 = pneg %p100
        %p241 = pneg %p97
        %p242 = pneg %p121
        %p243 = pneg %p118
        %p244 = pneg %p149
        %p245 = pneg %p146
        %s246 = smul.u32 2, %s21
        %p247 = scmp.lt.s32.totalorder %s20, 1
        %s248 = scalar_select %p247, %s20, 1
        %p249 = scmp.lt.s32.totalorder %s246, 1
        %s250 = scalar_select %p249, %s246, 1
        %s251 = smul.addr %s248, 2
        %s252 = sadd.s32 %s250, %s251
        %s253 = smul.addr %s252, 8
        %s254 = scalar_lea.vmem %s4, %s253
        %s255 = smul.u32 2, %s21
        %p256 = scmp.lt.s32.totalorder %s20, 1
        %s257 = scalar_select %p256, %s20, 1
        %p258 = scmp.lt.s32.totalorder %s255, 1
        %s259 = scalar_select %p258, %s255, 1
        %s260 = smul.addr %s257, 2
        %s261 = sadd.s32 %s259, %s260
        %s262 = smul.addr %s261, 8
        %s263 = scalar_lea.vmem %s0, %s262
        %s264 = smul.u32 2, %s21
        %p265 = scmp.lt.s32.totalorder %s20, 1
        %s266 = scalar_select %p265, %s20, 1
        %p267 = scmp.lt.s32.totalorder %s21, 0
        %s268 = scalar_select %p267, %s21, 0
        %s269 = sadd.s32 %s268, %s266
        %s270 = smul.addr %s269, 2
        %s271 = scalar_lea.vmem %s1, %s270
        %s272 = smul.u32 2, %s21
        %p273 = scmp.lt.s32.totalorder %s20, 1
        %s274 = scalar_select %p273, %s20, 1
        %p275 = scmp.lt.s32.totalorder %s272, 1
        %s276 = scalar_select %p275, %s272, 1
        %s277 = smul.addr %s274, 2
        %s278 = sadd.s32 %s276, %s277
        %s279 = smul.addr %s278, 8
        %s280 = scalar_lea.vmem %s4, %s279
        %s281 = smul.u32 2, %s21
        %v282 = vld [vmem:[%s263] sm:$0xff]
        %v283 = vld [vmem:[%s263 + $0x8] sm:$0xff]
        %v284 = vld [vmem:[%s271] sm:$0x3]
        %vm285 = vcmask 31744
        %v286 = vsel %vm285, %v282, 0.0
        %v287 = vsel %vm285, %v283, 0.0
        %v288 = vsel %vm285, %v284, 0.0
        %v289 = vld [vmem:[#allocation2] sm:$0xff]
        %v290 = vld [vmem:[#allocation2 + $0x8] sm:$0xff]
        %v291 = vld [vmem:[#allocation2 + $0x10] sm:$0xff]
        %v292 = vld [vmem:[#allocation2 + $0x18] sm:$0xff]
        %v293 = vld [vmem:[#allocation2 + $0x20] sm:$0xff]
        %v294 = vld [vmem:[#allocation2 + $0x28] sm:$0xff]
        %v295 = vld [vmem:[#allocation2 + $0x30] sm:$0xff]
        %v296 = vld [vmem:[#allocation2 + $0x38] sm:$0xff]
        %v297 = vld [vmem:[#allocation2 + $0x40] sm:$0xff]
        %v298 = vld [vmem:[#allocation2 + $0x48] sm:$0xff]
        %v299 = vld [vmem:[#allocation2 + $0x50] sm:$0xff]
        %v300 = vld [vmem:[#allocation2 + $0x58] sm:$0xff]
        %v301 = vld [vmem:[#allocation2 + $0x60] sm:$0xff]
        %v302 = vld [vmem:[#allocation2 + $0x68] sm:$0xff]
        %v303 = vld [vmem:[#allocation2 + $0x70] sm:$0xff]
        %v304 = vld [vmem:[#allocation2 + $0x78] sm:$0xff]
        %v305 = vld [vmem:[#allocation2 + $0x80] sm:$0xff]
        %v306 = vld [vmem:[#allocation2 + $0x88] sm:$0xff]
        %v307 = vld [vmem:[#allocation2 + $0x90] sm:$0xff]
        %v308 = vld [vmem:[#allocation2 + $0x98] sm:$0xff]
        %v309 = vld [vmem:[#allocation2 + $0xa0] sm:$0xff]
        %v310 = vld [vmem:[#allocation2 + $0xa8] sm:$0xff]
        %v311 = vld [vmem:[#allocation2 + $0xb0] sm:$0xff]
        %v312 = vld [vmem:[#allocation2 + $0xb8] sm:$0xff]
        %v313 = vld [vmem:[#allocation2 + $0xc0] sm:$0xff]
        %v314 = vld [vmem:[#allocation2 + $0xc8] sm:$0xff]
        %v315 = vld [vmem:[#allocation2 + $0xd0] sm:$0xff]
        %v316 = vld [vmem:[#allocation2 + $0xd8] sm:$0xff]
        %v317 = vld [vmem:[#allocation2 + $0xe0] sm:$0xff]
        %v318 = vld [vmem:[#allocation2 + $0xe8] sm:$0xff]
        %v319 = vld [vmem:[#allocation2 + $0xf0] sm:$0xff]
        %v320 = vld [vmem:[#allocation2 + $0xf8] sm:$0xff]
        %v321 = vld [vmem:[#allocation2 + $0x100] sm:$0xff]
        %v322 = vld [vmem:[#allocation2 + $0x108] sm:$0xff]
        %v323 = vld [vmem:[#allocation2 + $0x110] sm:$0xff]
        %v324 = vld [vmem:[#allocation2 + $0x118] sm:$0xff]
        %v325 = vld [vmem:[#allocation2 + $0x120] sm:$0xff]
        %v326 = vld [vmem:[#allocation2 + $0x128] sm:$0xff]
        %v327 = vld [vmem:[#allocation2 + $0x130] sm:$0xff]
        %v328 = vld [vmem:[#allocation2 + $0x138] sm:$0xff]
        %v329 = vld [vmem:[#allocation2 + $0x140] sm:$0xff]
        %v330 = vld [vmem:[#allocation2 + $0x148] sm:$0xff]
        %v331 = vld [vmem:[#allocation2 + $0x150] sm:$0xff]
        %v332 = vld [vmem:[#allocation2 + $0x158] sm:$0xff]
        %v333 = vld [vmem:[#allocation2 + $0x160] sm:$0xff]
        %v334 = vld [vmem:[#allocation2 + $0x168] sm:$0xff]
        %v335 = vld [vmem:[#allocation2 + $0x170] sm:$0xff]
        %v336 = vld [vmem:[#allocation2 + $0x178] sm:$0xff]
        %v337 = vld [vmem:[#allocation2 + $0x180] sm:$0xff]
        %v338 = vld [vmem:[#allocation2 + $0x188] sm:$0xff]
        %v339 = vld [vmem:[#allocation2 + $0x190] sm:$0xff]
        %v340 = vld [vmem:[#allocation2 + $0x198] sm:$0xff]
        %v341 = vld [vmem:[#allocation2 + $0x1a0] sm:$0xff]
        %v342 = vld [vmem:[#allocation2 + $0x1a8] sm:$0xff]
        %v343 = vld [vmem:[#allocation2 + $0x1b0] sm:$0xff]
        %v344 = vld [vmem:[#allocation2 + $0x1b8] sm:$0xff]
        %v345 = vld [vmem:[#allocation2 + $0x1c0] sm:$0xff]
        %v346 = vld [vmem:[#allocation2 + $0x1c8] sm:$0xff]
        %v347 = vld [vmem:[#allocation2 + $0x1d0] sm:$0xff]
        %v348 = vld [vmem:[#allocation2 + $0x1d8] sm:$0xff]
        %v349 = vld [vmem:[#allocation2 + $0x1e0] sm:$0xff]
        %v350 = vld [vmem:[#allocation2 + $0x1e8] sm:$0xff]
        %v351 = vld [vmem:[#allocation2 + $0x1f0] sm:$0xff]
        %v352 = vld [vmem:[#allocation2 + $0x1f8] sm:$0xff]
        %353 = vmatpush.msra.mxu0 %v349
        %354 = vmatpush.msra.mxu0 %v345
        %355 = vmatpush.msra.mxu0 %v341
        %356 = vmatpush.msra.mxu0 %v337
        %357 = vmatpush.msra.mxu0 %v333
        %358 = vmatpush.msra.mxu0 %v329
        %359 = vmatpush.msra.mxu0 %v325
        %360 = vmatpush.msra.mxu0 %v321
        %361 = vmatpush.msra.mxu0 %v317
        %362 = vmatpush.msra.mxu0 %v313
        %363 = vmatpush.msra.mxu0 %v309
        %364 = vmatpush.msra.mxu0 %v305
        %365 = vmatpush.msra.mxu0 %v301
        %366 = vmatpush.msra.mxu0 %v297
        %367 = vmatpush.msra.mxu0 %v293
        %368 = vmatpush.msra.mxu0 %v289
        %369 = vmatmul.f32.gmra.mxu0 %v286
        %v370 = vpop.f32.mrf.mxu0
        %v371 = vadd.f32 0.0, %v370
        %372 = vmatmul.f32.gmra.mxu0 %v287
        %v373 = vpop.f32.mrf.mxu0
        %v374 = vadd.f32 0.0, %v373
        %375 = vdwg.mxu0
        %376 = vmatpush.msra.mxu0 %v350
        %377 = vmatpush.msra.mxu0 %v346
        %378 = vmatpush.msra.mxu0 %v342
        %379 = vmatpush.msra.mxu0 %v338
        %380 = vmatpush.msra.mxu0 %v334
        %381 = vmatpush.msra.mxu0 %v330
        %382 = vmatpush.msra.mxu0 %v326
        %383 = vmatpush.msra.mxu0 %v322
        %384 = vmatpush.msra.mxu0 %v318
        %385 = vmatpush.msra.mxu0 %v314
        %386 = vmatpush.msra.mxu0 %v310
        %387 = vmatpush.msra.mxu0 %v306
        %388 = vmatpush.msra.mxu0 %v302
        %389 = vmatpush.msra.mxu0 %v298
        %390 = vmatpush.msra.mxu0 %v294
        %391 = vmatpush.msra.mxu0 %v290
        %392 = vmatmul.f32.gmra.mxu0 %v286
        %v393 = vpop.f32.mrf.mxu0
        %v394 = vadd.f32 0.0, %v393
        %395 = vmatmul.f32.gmra.mxu0 %v287
        %v396 = vpop.f32.mrf.mxu0
        %v397 = vadd.f32 0.0, %v396
        %398 = vdwg.mxu0
        %399 = vmatpush.msra.mxu0 %v351
        %400 = vmatpush.msra.mxu0 %v347
        %401 = vmatpush.msra.mxu0 %v343
        %402 = vmatpush.msra.mxu0 %v339
        %403 = vmatpush.msra.mxu0 %v335
        %404 = vmatpush.msra.mxu0 %v331
        %405 = vmatpush.msra.mxu0 %v327
        %406 = vmatpush.msra.mxu0 %v323
        %407 = vmatpush.msra.mxu0 %v319
        %408 = vmatpush.msra.mxu0 %v315
        %409 = vmatpush.msra.mxu0 %v311
        %410 = vmatpush.msra.mxu0 %v307
        %411 = vmatpush.msra.mxu0 %v303
        %412 = vmatpush.msra.mxu0 %v299
        %413 = vmatpush.msra.mxu0 %v295
        %414 = vmatpush.msra.mxu0 %v291
        %415 = vmatmul.f32.gmra.mxu0 %v286
        %v416 = vpop.f32.mrf.mxu0
        %v417 = vadd.f32 0.0, %v416
        %418 = vmatmul.f32.gmra.mxu0 %v287
        %v419 = vpop.f32.mrf.mxu0
        %v420 = vadd.f32 0.0, %v419
        %421 = vdwg.mxu0
        %422 = vmatpush.msra.mxu0 %v352
        %423 = vmatpush.msra.mxu0 %v348
        %424 = vmatpush.msra.mxu0 %v344
        %425 = vmatpush.msra.mxu0 %v340
        %426 = vmatpush.msra.mxu0 %v336
        %427 = vmatpush.msra.mxu0 %v332
        %428 = vmatpush.msra.mxu0 %v328
        %429 = vmatpush.msra.mxu0 %v324
        %430 = vmatpush.msra.mxu0 %v320
        %431 = vmatpush.msra.mxu0 %v316
        %432 = vmatpush.msra.mxu0 %v312
        %433 = vmatpush.msra.mxu0 %v308
        %434 = vmatpush.msra.mxu0 %v304
        %435 = vmatpush.msra.mxu0 %v300
        %436 = vmatpush.msra.mxu0 %v296
        %437 = vmatpush.msra.mxu0 %v292
        %438 = vmatmul.f32.gmra.mxu0 %v286
        %v439 = vpop.f32.mrf.mxu0
        %v440 = vadd.f32 0.0, %v439
        %441 = vmatmul.f32.gmra.mxu0 %v287
        %v442 = vpop.f32.mrf.mxu0
        %v443 = vadd.f32 0.0, %v442
        %444 = vdwg.mxu0
        %445 = vmatpush.msra.mxu0 %v349
        %446 = vmatpush.msra.mxu0 %v345
        %447 = vmatpush.msra.mxu0 %v341
        %448 = vmatpush.msra.mxu0 %v337
        %449 = vmatpush.msra.mxu0 %v333
        %450 = vmatpush.msra.mxu0 %v329
        %451 = vmatpush.msra.mxu0 %v325
        %452 = vmatpush.msra.mxu0 %v321
        %453 = vmatpush.msra.mxu0 %v317
        %454 = vmatpush.msra.mxu0 %v313
        %455 = vmatpush.msra.mxu0 %v309
        %456 = vmatpush.msra.mxu0 %v305
        %457 = vmatpush.msra.mxu0 %v301
        %458 = vmatpush.msra.mxu0 %v297
        %459 = vmatpush.msra.mxu0 %v293
        %460 = vmatpush.msra.mxu0 %v289
        %461 = vmatmul.f32.gmra.mxu0 %v288
        %v462 = vpop.f32.mrf.mxu0
        %v463 = vadd.f32 0.0, %v462
        %464 = vdwg.mxu0
        %465 = vmatpush.msra.mxu0 %v352
        %466 = vmatpush.msra.mxu0 %v348
        %467 = vmatpush.msra.mxu0 %v344
        %468 = vmatpush.msra.mxu0 %v340
        %469 = vmatpush.msra.mxu0 %v336
        %470 = vmatpush.msra.mxu0 %v332
        %471 = vmatpush.msra.mxu0 %v328
        %472 = vmatpush.msra.mxu0 %v324
        %473 = vmatpush.msra.mxu0 %v320
        %474 = vmatpush.msra.mxu0 %v316
        %475 = vmatpush.msra.mxu0 %v312
        %476 = vmatpush.msra.mxu0 %v308
        %477 = vmatpush.msra.mxu0 %v304
        %478 = vmatpush.msra.mxu0 %v300
        %479 = vmatpush.msra.mxu0 %v296
        %480 = vmatpush.msra.mxu0 %v292
        %481 = vmatmul.f32.gmra.mxu0 %v288
        %v482 = vpop.f32.mrf.mxu0
        %v483 = vadd.f32 0.0, %v482
        %484 = vdwg.mxu0
        %v485 = vlaneseq
        %v486 = vshrl.u32 %v485, 7
        %v487 = vadd.s32 %v486, 8
        %vm488 = vcmp.eq.s32.totalorder %v486, 0
        %vm489 = vcmp.eq.s32.totalorder %v487, 0
        %v490 = vrot.slane %v371, 7
        %v491 = vrot.slane %v374, 7
        %vm492 = vcmp.lt.s32.totalorder %v486, 1
        %v493 = vsel %vm492, %v490, %v491
        %v494 = vsel %vm492, %v491, %v490
        %v495 = vsel %vm488, 1, 0
        %v496 = vsel %vm489, 1, 0
        %vm497 = vcmp.eq.s32.totalorder %v495, 1
        %vm498 = vcmp.eq.s32.totalorder %v496, 1
        %v499 = vperm.slane %v463, 0
        %v500 = vsel %vm497, %v499, %v494
        %v501 = vsel %vm498, %v499, %v493
        %vm502 = vcmp.eq.s32.totalorder %v486, 15
        %vm503 = vcmp.eq.s32.totalorder %v487, 15
        %v504 = vrot.slane %v440, 1
        %v505 = vrot.slane %v443, 1
        %vm506 = vcmp.lt.s32.totalorder %v486, 7
        %v507 = vsel %vm506, %v504, %v505
        %v508 = vsel %vm506, %v505, %v504
        %v509 = vsel %vm502, 1, 0
        %v510 = vsel %vm503, 1, 0
        %vm511 = vcmp.eq.s32.totalorder %v509, 1
        %vm512 = vcmp.eq.s32.totalorder %v510, 1
        %v513 = vperm.slane %v483, 1
        %v514 = vsel %vm511, %v513, %v507
        %v515 = vsel %vm512, %v513, %v508
        %v516 = vld [vmem:[%s3] sm:$0x1]
        %v517 = vadd.f32 %v500, %v394
        %v518 = vadd.f32 %v501, %v397
        %v520 = vperm.slane %v516, 0
        %v522 = vadd.f32 %v517, %v520
        %v523 = vadd.f32 %v518, %v520
        %v524 = vadd.f32 %v417, %v514
        %v525 = vadd.f32 %v420, %v515
        %v526 = vadd.f32 %v524, %v520
        %v527 = vadd.f32 %v525, %v520
        %530 = vrot.lane.b32.xlu0 %v526, 4
        %v531 = vpop.permute.xlu0 %530
        %532 = vrot.lane.b32.xlu0 %v527, 4
        %v533 = vpop.permute.xlu0 %532
        %v536 = vsel %vm285, %v522, %v531
        %v537 = vsel %vm285, %v523, %v533
        %vm538 = vcmask 64512
        %539 = vst.msk [vmem:[%s280] sm:$0xff] %vm538, %v536
        %540 = vst.msk [vmem:[%s280 + $0x8] sm:$0xff] %vm538, %v537
        %s541 = smul.u32 2, %s21
        %p542 = scmp.lt.s32.totalorder %s20, 1
        %s543 = scalar_select %p542, %s20, 1
        %p544 = scmp.lt.s32.totalorder %s541, 1
        %s545 = scalar_select %p544, %s541, 1
        %s546 = smul.addr %s543, 2
        %s547 = sadd.s32 %s545, %s546
        %s548 = smul.addr %s547, 8
        %s549 = scalar_lea.vmem %s4, %s548
        // Predicated region
        $region41: #{tpu_custom_call.1} parent=35 // pred_check
          %p550 = pneg %p146
        $region42: #{tpu_custom_call.1} parent=35 // pred_check_branch
          %552 = sbr.rel (%p550) target = $region44
        $region43: #{tpu_custom_call.1} parent=35 // pred_region
          %s553 = smul.u32 2, %s21
        $region44: #{tpu_custom_call.1} parent=35 // pred_fallthru
          _
      $region36: #{tpu_custom_call.1} parent=5 // pred_fallthru
        _
      %p554 = scmp.le.s32.totalorder 2, %s11
      // Predicated region
      $region45: #{tpu_custom_call.1} parent=5 // pred_check
        %p555 = pneg %p554
      $region46: #{tpu_custom_call.1} parent=5 // pred_check_branch
        %557 = sbr.rel (%p555) target = $region48
      $region47: #{tpu_custom_call.1} parent=5 // pred_region
        %s558 = ssub.s32 %s11, 2
        // Predicated region
        $region49: #{tpu_custom_call.1} parent=47 // pred_check
          %p559 = pneg %p152
        $region50: #{tpu_custom_call.1} parent=47 // pred_check_branch
          %561 = sbr.rel (%p559) target = $region52
        $region51: #{tpu_custom_call.1} parent=47 // pred_region
          %s562 = smul.u32 2, %s23
          %p563 = scmp.lt.s32.totalorder %s22, 1
          %s564 = scalar_select %p563, %s22, 1
          %p565 = scmp.lt.s32.totalorder %s562, 1
          %s566 = scalar_select %p565, %s562, 1
          %s567 = smul.addr %s564, 2
          %s568 = sadd.s32 %s566, %s567
          %s569 = smul.addr %s568, 8
          %s570 = scalar_lea.vmem %s4, %s569
        $region52: #{tpu_custom_call.1} parent=47 // pred_fallthru
          _
      $region48: #{tpu_custom_call.1} parent=5 // pred_fallthru
        _
    $region6: #{tpu_custom_call.1} parent=1 // loop_footer
      %s15 = sadd.s32 1, %s11
    $region7: #{tpu_custom_call.1} parent=1 // loop_footer_branch
      %10 = sbr.rel target = $region3
    $region8: #{tpu_custom_call.1} parent=1 // loop_exit
      _
    %571 = vsyncpa [#allocation3], 1
    %s572 = scalar_lea.sflag [#allocation3], 1
    %573 = vsyncpa %s572, 1

</llo_original>
